<compile_context>
chip_gen: v5e
topology: v5e:2x2
jax: 0.10.0
libtpu: 0.0.40
codegen_flags: <defaults>
</compile_context>

<pallas_src>
import math

import jax
import jax.numpy as jnp
from jax import lax
from jax.experimental import pallas as pl
from jax.experimental.pallas import tpu as pltpu


# ----------------------------------------------------------------------------
# Fused kernel: encoder (2x conv1d k=3 'same') + global branch + local branch.
# One grid step = BB batch elements, processed as a flat (BB*L, C) row block.
# ----------------------------------------------------------------------------
def _slotformer_kernel(xi_ref, w1_ref, b1_ref, w2_ref, b2_ref,
                       wf_ref, bg_ref, q_ref, inter_ref, comb_ref):
    # xi_ref   : (BB*L, 3*Cin) bf16   im2col'd ECG (taps folded in wrapper)
    # w1_ref   : (3*Cin, D)    bf16   conv1 weight (taps along K)
    # w2_ref   : (3*D, D)      bf16   conv2 weight (taps along K)
    # wf_ref   : (D, 3*D)      bf16   fused [Wk | Wv | Wg]
    # b1/b2/bg : (1, D)        f32
    # q_ref    : (S, D)        bf16   precomputed slots @ Wq
    # inter_ref: (BB*L, D)     f32    encoder output (flat)
    # comb_ref : (BB, S+1, D)  f32    rows 0..S-1 = local slots, row S = glob
    M = xi_ref.shape[0]                 # BB * L
    BB = comb_ref.shape[0]
    L = M // BB
    D = inter_ref.shape[1]
    S = comb_ref.shape[1] - 1

    # ---- encoder conv1 (k=3, pad=1): one (M, 3Cin) @ (3Cin, D) matmul -------
    h = jnp.dot(xi_ref[...], w1_ref[...],
                preferred_element_type=jnp.float32)
    h = jnp.maximum(h + b1_ref[...], 0.0)                         # (M, D) f32

    # ---- encoder conv2 taps: XLU rolls + boundary masks ---------------------
    # Roll wraps across both the sequence edge and intra-block batch
    # boundaries; the (t == 0 / t == L-1) masks zero exactly those rows,
    # reproducing zero-padded 'same' convolution per batch element.
    r = lax.broadcasted_iota(jnp.int32, (M, D), 0)
    t = r % L
    h_prev = jnp.where(t == 0, 0.0, pltpu.roll(h, shift=1, axis=0))
    h_next = jnp.where(t == L - 1, 0.0, pltpu.roll(h, shift=M - 1, axis=0))
    hi = jnp.concatenate([h_prev, h, h_next], axis=-1).astype(jnp.bfloat16)

    y = jnp.dot(hi, w2_ref[...],
                preferred_element_type=jnp.float32) + b2_ref[...]  # (M, D) f32
    inter_ref[...] = y.astype(inter_ref.dtype)

    # ---- fused projection: [k | v | g_rows] = y @ [Wk | Wv | Wg] ------------
    y_bf = y.astype(jnp.bfloat16)
    yw = jnp.dot(y_bf, wf_ref[...],
                 preferred_element_type=jnp.float32)               # (M, 3D)
    k = yw[:, :D].astype(jnp.bfloat16)
    v = yw[:, D:2 * D].astype(jnp.bfloat16)
    g_rows = yw[:, 2 * D:]                                         # f32

    q = q_ref[...]                                                 # (S, D) bf16
    scale = jnp.float32(1.0 / math.sqrt(D))
    inv_l = jnp.float32(1.0 / L)

    parts = []
    for b in range(BB):                    # static unroll over the batch block
        k_b = k[b * L:(b + 1) * L, :]
        v_b = v[b * L:(b + 1) * L, :]
        # logits = q @ k_b^T without materializing a transpose in user code.
        logits = lax.dot_general(q, k_b, (((1,), (1,)), ((), ())),
                                 preferred_element_type=jnp.float32) * scale
        m = jnp.max(logits, axis=-1, keepdims=True)
        p = jnp.exp(logits - m)
        p = p * pl.reciprocal(jnp.sum(p, axis=-1, keepdims=True), approx=True)
        loc_b = jnp.dot(p.astype(jnp.bfloat16), v_b,
                        preferred_element_type=jnp.float32)        # (S, D)
        # global branch fused into the y projection: mean over time of Wg cols.
        glob_b = (jnp.sum(g_rows[b * L:(b + 1) * L, :], axis=0, keepdims=True)
                  * inv_l + bg_ref[...])                           # (1, D)
        parts.append(jnp.concatenate([loc_b, glob_b], axis=0))     # (S+1, D)

    comb = jnp.stack(parts, axis=0)                                # (BB, S+1, D)
    comb_ref[...] = comb.astype(comb_ref.dtype)


# ----------------------------------------------------------------------------
# Full SlotFormerPos2.forward (eval path: encoder(x, mask='all_true'))
# ----------------------------------------------------------------------------
def slotformer_pos2_forward(x, params, *, block_b=None):
    B, Cin, L = x.shape
    D = params["W1"].shape[-1]
    S = params["slots"].shape[0]
    assert L % 8 == 0, "L must be a multiple of 8 (sublane alignment)"

    if block_b is None:
        # Keep >= 2 grid steps so both v7x TensorCores get work; amortize the
        # per-step overhead by blocking the batch when it is larger than 2.
        block_b = B // 2 if (B % 2 == 0 and B >= 2) else 1
    assert B % block_b == 0
    steps = B // block_b
    M = block_b * L

    bf = jnp.bfloat16
    # --- XLA-side prep (pure layout / batch-invariant, done once per call) ---
    x_cl = jnp.transpose(x, (0, 2, 1))                       # (B, L, Cin)
    xp = jnp.pad(x_cl, ((0, 0), (1, 1), (0, 0)))
    xi = jnp.concatenate([xp[:, 0:L], xp[:, 1:L + 1], xp[:, 2:L + 2]],
                         axis=-1)                            # (B, L, 3*Cin)
    xi = xi.reshape(B * L, 3 * Cin).astype(bf)

    q = (params["slots"] @ params["Wq"]).astype(bf)          # (S, D), hoisted
    wf = jnp.concatenate([params["Wkv"], params["Wg"]],
                         axis=-1).astype(bf)                 # (D, 3D) fused
    w1 = params["W1"].astype(bf)
    w2 = params["W2"].astype(bf)

    inter_flat, comb = pl.pallas_call(
        _slotformer_kernel,
        out_shape=(
            jax.ShapeDtypeStruct((B * L, D), jnp.float32),       # intermediate
            jax.ShapeDtypeStruct((B, S + 1, D), jnp.float32),    # local|glob
        ),
        grid=(steps,),
        in_specs=[
            pl.BlockSpec((M, 3 * Cin), lambda i: (i, 0)),        # xi (im2col)
            pl.BlockSpec((3 * Cin, D), lambda i: (0, 0)),        # W1
            pl.BlockSpec((1, D), lambda i: (0, 0)),              # b1
            pl.BlockSpec((3 * D, D), lambda i: (0, 0)),          # W2
            pl.BlockSpec((1, D), lambda i: (0, 0)),              # b2
            pl.BlockSpec((D, 3 * D), lambda i: (0, 0)),          # [Wk|Wv|Wg]
            pl.BlockSpec((1, D), lambda i: (0, 0)),              # bg
            pl.BlockSpec((S, D), lambda i: (0, 0)),              # q = slots@Wq
        ],
        out_specs=(
            pl.BlockSpec((M, D), lambda i: (i, 0)),
            pl.BlockSpec((block_b, S + 1, D), lambda i: (i, 0, 0)),
        ),
        compiler_params=pltpu.CompilerParams(
            dimension_semantics=("parallel",)),
    )(xi, w1, params["b1"], w2, params["b2"], wf, params["bg"], q)

    intermediate = inter_flat.reshape(B, L, D)
    local = comb[:, :S, :]
    glob = comb[:, S, :]
    return intermediate, glob, local


# ----------------------------------------------------------------------------
# Parameters for the synthetic stand-in submodules (conv taps pre-folded).
# ----------------------------------------------------------------------------
def init_params(key, c_in, d, num_slots):
    ks = jax.random.split(key, 8)
    s = 0.1
    return {
        "W1": s * jax.random.normal(ks[0], (3 * c_in, d), jnp.float32),
        "b1": s * jax.random.normal(ks[1], (1, d), jnp.float32),
        "W2": s * jax.random.normal(ks[2], (3 * d, d), jnp.float32),
        "b2": s * jax.random.normal(ks[3], (1, d), jnp.float32),
        "Wg": s * jax.random.normal(ks[4], (d, d), jnp.float32),
        "bg": jnp.zeros((1, d), jnp.float32),
        "slots": s * jax.random.normal(ks[5], (num_slots, d), jnp.float32),
        "Wq": s * jax.random.normal(ks[6], (d, d), jnp.float32),
        "Wkv": s * jax.random.normal(ks[7], (d, 2 * d), jnp.float32),
    }


# ----------------------------------------------------------------------------
# Pure-JAX reference of the same forward pass (mirrors the kernel's bf16
# operand / f32 accumulation precision so the check stays tight).
# ----------------------------------------------------------------------------
def _reference_forward(x, params):
    B, Cin, L = x.shape
    D = params["W1"].shape[-1]
    bf, f32 = jnp.bfloat16, jnp.float32

    x_cl = jnp.transpose(x, (0, 2, 1))
    xp = jnp.pad(x_cl, ((0, 0), (1, 1), (0, 0)))
    xi = jnp.concatenate([xp[:, 0:L], xp[:, 1:L + 1], xp[:, 2:L + 2]],
                         axis=-1).astype(bf)
    h = jax.nn.relu(jnp.einsum("blk,kd->bld", xi, params["W1"].astype(bf),
                               preferred_element_type=f32) + params["b1"])
    hp = jnp.pad(h, ((0, 0), (1, 1), (0, 0)))
    hi = jnp.concatenate([hp[:, 0:L], hp[:, 1:L + 1], hp[:, 2:L + 2]],
                         axis=-1).astype(bf)
    y = jnp.einsum("blk,kd->bld", hi, params["W2"].astype(bf),
                   preferred_element_type=f32) + params["b2"]

    y_bf = y.astype(bf)
    g_rows = jnp.einsum("bld,de->ble", y_bf, params["Wg"].astype(bf),
                        preferred_element_type=f32)
    g = jnp.mean(g_rows, axis=1) + params["bg"]

    kv = jnp.einsum("bld,de->ble", y_bf, params["Wkv"].astype(bf),
                    preferred_element_type=f32)
    k, v = kv[..., :D], kv[..., D:]
    q = (params["slots"] @ params["Wq"]).astype(bf)
    logits = jnp.einsum("sd,bld->bsl", q, k.astype(bf),
                        preferred_element_type=f32) / jnp.sqrt(f32(D))
    p = jax.nn.softmax(logits, axis=-1)
    local = jnp.einsum("bsl,bld->bsd", p.astype(bf), v.astype(bf),
                       preferred_element_type=f32)
    return y, g, local


if __name__ == "__main__":
    B, C_IN, L = 2, 4, 128          # ECG: (batch, leads, time)  -- NCW
    D = 32                          # encoder_args['output_dims']
    NUM_SLOTS = 8                   # local_branch_args['num_slots']

    key = jax.random.PRNGKey(0)
    k_x, k_p, k_x2 = jax.random.split(key, 3)
    x = jax.random.normal(k_x, (B, C_IN, L), jnp.float32)
    params = init_params(k_p, C_IN, D, NUM_SLOTS)

    fwd = jax.jit(slotformer_pos2_forward, static_argnames=("block_b",))

    # --- main run: B=2 -> block_b=1, 2 grid steps (both v7x TCs busy) --------
    intermediate, global_repr, local_repr = fwd(x, params)
    jax.block_until_ready((intermediate, global_repr, local_repr))

    assert intermediate.shape == (B, L, D)
    assert global_repr.shape == (B, D)
    assert local_repr.shape == (B, NUM_SLOTS, D)

    ref_i, ref_g, ref_l = _reference_forward(x, params)
    assert jnp.allclose(intermediate, ref_i, rtol=1e-2, atol=1e-2)
    assert jnp.allclose(global_repr, ref_g, rtol=1e-2, atol=1e-2)
    assert jnp.allclose(local_repr, ref_l, rtol=1e-2, atol=1e-2)

    # --- batch-blocked run: B=4, BB=2 (exercises the intra-block masking) ----
    x2 = jax.random.normal(k_x2, (4, C_IN, L), jnp.float32)
    i2, g2, l2 = fwd(x2, params, block_b=2)
    jax.block_until_ready((i2, g2, l2))
    r_i2, r_g2, r_l2 = _reference_forward(x2, params)
    assert jnp.allclose(i2, r_i2, rtol=1e-2, atol=1e-2)
    assert jnp.allclose(g2, r_g2, rtol=1e-2, atol=1e-2)
    assert jnp.allclose(l2, r_l2, rtol=1e-2, atol=1e-2)

    print("KERNEL_OK")
</pallas_src>

<mosaic_0001>
module attributes {stable_mosaic.version = 11 : i64} {
  func.func @_slotformer_kernel(%arg0: i32, %arg1: memref<128x12xbf16, #tpu.memory_space<vmem>>, %arg2: memref<12x32xbf16, #tpu.memory_space<vmem>>, %arg3: memref<1x32xf32, #tpu.memory_space<vmem>>, %arg4: memref<96x32xbf16, #tpu.memory_space<vmem>>, %arg5: memref<1x32xf32, #tpu.memory_space<vmem>>, %arg6: memref<32x96xbf16, #tpu.memory_space<vmem>>, %arg7: memref<1x32xf32, #tpu.memory_space<vmem>>, %arg8: memref<8x32xbf16, #tpu.memory_space<vmem>>, %arg9: memref<128x32xf32, #tpu.memory_space<vmem>>, %arg10: memref<1x9x32xf32, #tpu.memory_space<vmem>>) attributes {dimension_semantics = [#tpu.dimension_semantics<parallel>], iteration_bounds = array<i64: 2>, scalar_prefetch = 0 : i64, scratch_operands = 0 : i64, tpu.core_type = #tpu.core_type<tc>, window_params = [{transform_indices = @transform_0, window_bounds = array<i64: 128, 12>}, {pipeline_mode = #tpu.pipeline_mode<synchronous>, transform_indices = @transform_1, window_bounds = array<i64: 12, 32>}, {pipeline_mode = #tpu.pipeline_mode<synchronous>, transform_indices = @transform_2, window_bounds = array<i64: 1, 32>}, {pipeline_mode = #tpu.pipeline_mode<synchronous>, transform_indices = @transform_3, window_bounds = array<i64: 96, 32>}, {pipeline_mode = #tpu.pipeline_mode<synchronous>, transform_indices = @transform_4, window_bounds = array<i64: 1, 32>}, {pipeline_mode = #tpu.pipeline_mode<synchronous>, transform_indices = @transform_5, window_bounds = array<i64: 32, 96>}, {pipeline_mode = #tpu.pipeline_mode<synchronous>, transform_indices = @transform_6, window_bounds = array<i64: 1, 32>}, {pipeline_mode = #tpu.pipeline_mode<synchronous>, transform_indices = @transform_7, window_bounds = array<i64: 8, 32>}, {transform_indices = @transform_8, window_bounds = array<i64: 128, 32>}, {transform_indices = @transform_9, window_bounds = array<i64: 1, 9, 32>}]} {
    %c0 = arith.constant 0 : index
    %c0_0 = arith.constant 0 : index
    %0 = vector.load %arg1[%c0, %c0_0] : memref<128x12xbf16, #tpu.memory_space<vmem>>, vector<128x12xbf16>
    %c0_1 = arith.constant 0 : index
    %c0_2 = arith.constant 0 : index
    %1 = vector.load %arg2[%c0_1, %c0_2] : memref<12x32xbf16, #tpu.memory_space<vmem>>, vector<12x32xbf16>
    %cst = arith.constant dense<0.000000e+00> : vector<128x32xf32>
    %2 = tpu.matmul %0, %1, %cst {dimension_numbers = #tpu.dot_dimension_numbers<[1], [0], [0], [1], [0, 0, 1, 1], [], []>} : vector<128x12xbf16>, vector<12x32xbf16>, vector<128x32xf32> -> vector<128x32xf32>
    %c0_3 = arith.constant 0 : index
    %c0_4 = arith.constant 0 : index
    %3 = vector.load %arg3[%c0_3, %c0_4] : memref<1x32xf32, #tpu.memory_space<vmem>>, vector<1x32xf32>
    %4 = vector.broadcast %3 : vector<1x32xf32> to vector<128x32xf32>
    %5 = arith.addf %2, %4 : vector<128x32xf32>
    %cst_5 = arith.constant 0.000000e+00 : f32
    %6 = vector.broadcast %cst_5 : f32 to vector<128x32xf32>
    %7 = arith.maximumf %5, %6 : vector<128x32xf32>
    %8 = tpu.iota {dimensions = array<i32: 0>} : vector<128x32xi32>
    %c128_i32 = arith.constant 128 : i32
    %c0_i32 = arith.constant 0 : i32
    %9 = arith.cmpi eq, %c128_i32, %c0_i32 : i32
    %c1_i32 = arith.constant 1 : i32
    %10 = arith.select %9, %c1_i32, %c128_i32 : i32
    %11 = vector.broadcast %10 : i32 to vector<128x32xi32>
    %12 = arith.remsi %8, %11 : vector<128x32xi32>
    %c0_i32_6 = arith.constant 0 : i32
    %13 = vector.broadcast %c0_i32_6 : i32 to vector<128x32xi32>
    %14 = arith.cmpi ne, %12, %13 : vector<128x32xi32>
    %c0_i32_7 = arith.constant 0 : i32
    %15 = vector.broadcast %c0_i32_7 : i32 to vector<128x32xi32>
    %16 = arith.cmpi slt, %12, %15 : vector<128x32xi32>
    %c0_i32_8 = arith.constant 0 : i32
    %17 = arith.cmpi slt, %10, %c0_i32_8 : i32
    %18 = vector.broadcast %17 : i1 to vector<128x32xi1>
    %19 = vector.broadcast %18 : vector<128x32xi1> to vector<128x32xi1>
    %20 = arith.xori %16, %19 : vector<128x32xi1>
    %21 = arith.andi %20, %14 : vector<128x32xi1>
    %22 = vector.broadcast %10 : i32 to vector<128x32xi32>
    %23 = arith.addi %12, %22 : vector<128x32xi32>
    %24 = arith.select %21, %23, %12 : vector<128x32xi1>, vector<128x32xi32>
    %c0_i32_9 = arith.constant 0 : i32
    %25 = vector.broadcast %c0_i32_9 : i32 to vector<128x32xi32>
    %26 = arith.cmpi eq, %24, %25 : vector<128x32xi32>
    %c1_i32_10 = arith.constant 1 : i32
    %27 = tpu.dynamic_rotate %7 by %c1_i32_10 dim 0 : vector<128x32xf32>, i32 -> vector<128x32xf32>
    %cst_11 = arith.constant 0.000000e+00 : f32
    %28 = vector.broadcast %cst_11 : f32 to vector<128x32xf32>
    %29 = arith.select %26, %28, %27 : vector<128x32xi1>, vector<128x32xf32>
    %c127_i32 = arith.constant 127 : i32
    %30 = vector.broadcast %c127_i32 : i32 to vector<128x32xi32>
    %31 = arith.cmpi eq, %24, %30 : vector<128x32xi32>
    %c127_i32_12 = arith.constant 127 : i32
    %32 = tpu.dynamic_rotate %7 by %c127_i32_12 dim 0 : vector<128x32xf32>, i32 -> vector<128x32xf32>
    %cst_13 = arith.constant 0.000000e+00 : f32
    %33 = vector.broadcast %cst_13 : f32 to vector<128x32xf32>
    %34 = arith.select %31, %33, %32 : vector<128x32xi1>, vector<128x32xf32>
    %35 = tpu.concatenate %29, %7, %34 in 1 : vector<128x32xf32>, vector<128x32xf32>, vector<128x32xf32> -> vector<128x96xf32>
    %36 = arith.truncf %35 : vector<128x96xf32> to vector<128x96xbf16>
    %c0_14 = arith.constant 0 : index
    %c0_15 = arith.constant 0 : index
    %37 = vector.load %arg4[%c0_14, %c0_15] : memref<96x32xbf16, #tpu.memory_space<vmem>>, vector<96x32xbf16>
    %cst_16 = arith.constant dense<0.000000e+00> : vector<128x32xf32>
    %38 = tpu.matmul %36, %37, %cst_16 {dimension_numbers = #tpu.dot_dimension_numbers<[1], [0], [0], [1], [0, 0, 1, 1], [], []>} : vector<128x96xbf16>, vector<96x32xbf16>, vector<128x32xf32> -> vector<128x32xf32>
    %c0_17 = arith.constant 0 : index
    %c0_18 = arith.constant 0 : index
    %39 = vector.load %arg5[%c0_17, %c0_18] : memref<1x32xf32, #tpu.memory_space<vmem>>, vector<1x32xf32>
    %40 = vector.broadcast %39 : vector<1x32xf32> to vector<128x32xf32>
    %41 = arith.addf %38, %40 : vector<128x32xf32>
    %c0_19 = arith.constant 0 : index
    %c0_20 = arith.constant 0 : index
    %42 = vector.load %arg9[%c0_19, %c0_20] : memref<128x32xf32, #tpu.memory_space<vmem>>, vector<128x32xf32>
    tpu.vector_store %arg9[%c0_19, %c0_20], %41 {strides = array<i32>} : memref<128x32xf32, #tpu.memory_space<vmem>>, vector<128x32xf32>,
    %43 = arith.truncf %41 : vector<128x32xf32> to vector<128x32xbf16>
    %c0_21 = arith.constant 0 : index
    %c0_22 = arith.constant 0 : index
    %44 = vector.load %arg6[%c0_21, %c0_22] : memref<32x96xbf16, #tpu.memory_space<vmem>>, vector<32x96xbf16>
    %cst_23 = arith.constant dense<0.000000e+00> : vector<128x96xf32>
    %45 = tpu.matmul %43, %44, %cst_23 {dimension_numbers = #tpu.dot_dimension_numbers<[1], [0], [0], [1], [0, 0, 1, 1], [], []>} : vector<128x32xbf16>, vector<32x96xbf16>, vector<128x96xf32> -> vector<128x96xf32>
    %46 = vector.extract_strided_slice %45 {offsets = [0, 0], sizes = [128, 32], strides = [1, 1]} : vector<128x96xf32> to vector<128x32xf32>
    %47 = arith.truncf %46 : vector<128x32xf32> to vector<128x32xbf16>
    %48 = vector.extract_strided_slice %45 {offsets = [0, 32], sizes = [128, 32], strides = [1, 1]} : vector<128x96xf32> to vector<128x32xf32>
    %49 = arith.truncf %48 : vector<128x32xf32> to vector<128x32xbf16>
    %50 = vector.extract_strided_slice %45 {offsets = [0, 64], sizes = [128, 32], strides = [1, 1]} : vector<128x96xf32> to vector<128x32xf32>
    %c0_24 = arith.constant 0 : index
    %c0_25 = arith.constant 0 : index
    %51 = vector.load %arg8[%c0_24, %c0_25] : memref<8x32xbf16, #tpu.memory_space<vmem>>, vector<8x32xbf16>
    %cst_26 = arith.constant dense<0.000000e+00> : vector<8x128xf32>
    %52 = tpu.matmul %51, %47, %cst_26 {dimension_numbers = #tpu.dot_dimension_numbers<[1], [1], [0], [0], [0, 0, 1, 0], [], []>} : vector<8x32xbf16>, vector<128x32xbf16>, vector<8x128xf32> -> vector<8x128xf32>
    %cst_27 = arith.constant 0.176776692 : f32
    %53 = vector.broadcast %cst_27 : f32 to vector<8x128xf32>
    %54 = arith.mulf %52, %53 : vector<8x128xf32>
    %cst_28 = arith.constant dense<0xFF800000> : vector<8xf32>
    %55 = vector.multi_reduction <maximumf>, %54, %cst_28 [1] : vector<8x128xf32> to vector<8xf32>
    %56 = vector.shape_cast %55 : vector<8xf32> to vector<8x1xf32>
    %57 = vector.broadcast %56 : vector<8x1xf32> to vector<8x128xf32>
    %58 = arith.subf %54, %57 : vector<8x128xf32>
    %59 = math.exp %58 : vector<8x128xf32>
    %cst_29 = arith.constant dense<0.000000e+00> : vector<8xf32>
    %60 = vector.multi_reduction <add>, %59, %cst_29 [1] : vector<8x128xf32> to vector<8xf32>
    %61 = vector.shape_cast %60 : vector<8xf32> to vector<8x1xf32>
    %62 = tpu.reciprocal %61 {approx = true} : vector<8x1xf32> -> vector<8x1xf32>
    %63 = vector.broadcast %62 : vector<8x1xf32> to vector<8x128xf32>
    %64 = arith.mulf %59, %63 : vector<8x128xf32>
    %65 = arith.truncf %64 : vector<8x128xf32> to vector<8x128xbf16>
    %cst_30 = arith.constant dense<0.000000e+00> : vector<8x32xf32>
    %66 = tpu.matmul %65, %49, %cst_30 {dimension_numbers = #tpu.dot_dimension_numbers<[1], [0], [0], [1], [0, 0, 1, 1], [], []>} : vector<8x128xbf16>, vector<128x32xbf16>, vector<8x32xf32> -> vector<8x32xf32>
    %cst_31 = arith.constant dense<0.000000e+00> : vector<32xf32>
    %67 = vector.multi_reduction <add>, %50, %cst_31 [0] : vector<128x32xf32> to vector<32xf32>
    %68 = vector.shape_cast %67 : vector<32xf32> to vector<1x32xf32>
    %cst_32 = arith.constant 7.812500e-03 : f32
    %69 = vector.broadcast %cst_32 : f32 to vector<1x32xf32>
    %70 = arith.mulf %68, %69 : vector<1x32xf32>
    %c0_33 = arith.constant 0 : index
    %c0_34 = arith.constant 0 : index
    %71 = vector.load %arg7[%c0_33, %c0_34] : memref<1x32xf32, #tpu.memory_space<vmem>>, vector<1x32xf32>
    %72 = arith.addf %70, %71 : vector<1x32xf32>
    %73 = tpu.concatenate %66, %72 in 0 : vector<8x32xf32>, vector<1x32xf32> -> vector<9x32xf32>
    %74 = vector.shape_cast %73 : vector<9x32xf32> to vector<1x9x32xf32>
    %c0_35 = arith.constant 0 : index
    %c0_36 = arith.constant 0 : index
    %c0_37 = arith.constant 0 : index
    %75 = vector.load %arg10[%c0_35, %c0_36, %c0_37] : memref<1x9x32xf32, #tpu.memory_space<vmem>>, vector<1x9x32xf32>
    tpu.vector_store %arg10[%c0_35, %c0_36, %c0_37], %74 {strides = array<i32>} : memref<1x9x32xf32, #tpu.memory_space<vmem>>, vector<1x9x32xf32>,
    return
  }
  func.func @transform_0(%arg0: i32) -> (i32, i32) {
    %c0_i32 = arith.constant 0 : i32
    %c0_i32_0 = arith.constant 0 : i32
    return %arg0, %c0_i32 : i32, i32
  }
  func.func @transform_1(%arg0: i32) -> (i32, i32) {
    %c0_i32 = arith.constant 0 : i32
    %c0_i32_0 = arith.constant 0 : i32
    %c0_i32_1 = arith.constant 0 : i32
    return %c0_i32, %c0_i32_0 : i32, i32
  }
  func.func @transform_2(%arg0: i32) -> (i32, i32) {
    %c0_i32 = arith.constant 0 : i32
    %c0_i32_0 = arith.constant 0 : i32
    %c0_i32_1 = arith.constant 0 : i32
    return %c0_i32, %c0_i32_0 : i32, i32
  }
  func.func @transform_3(%arg0: i32) -> (i32, i32) {
    %c0_i32 = arith.constant 0 : i32
    %c0_i32_0 = arith.constant 0 : i32
    %c0_i32_1 = arith.constant 0 : i32
    return %c0_i32, %c0_i32_0 : i32, i32
  }
  func.func @transform_4(%arg0: i32) -> (i32, i32) {
    %c0_i32 = arith.constant 0 : i32
    %c0_i32_0 = arith.constant 0 : i32
    %c0_i32_1 = arith.constant 0 : i32
    return %c0_i32, %c0_i32_0 : i32, i32
  }
  func.func @transform_5(%arg0: i32) -> (i32, i32) {
    %c0_i32 = arith.constant 0 : i32
    %c0_i32_0 = arith.constant 0 : i32
    %c0_i32_1 = arith.constant 0 : i32
    return %c0_i32, %c0_i32_0 : i32, i32
  }
  func.func @transform_6(%arg0: i32) -> (i32, i32) {
    %c0_i32 = arith.constant 0 : i32
    %c0_i32_0 = arith.constant 0 : i32
    %c0_i32_1 = arith.constant 0 : i32
    return %c0_i32, %c0_i32_0 : i32, i32
  }
  func.func @transform_7(%arg0: i32) -> (i32, i32) {
    %c0_i32 = arith.constant 0 : i32
    %c0_i32_0 = arith.constant 0 : i32
    %c0_i32_1 = arith.constant 0 : i32
    return %c0_i32, %c0_i32_0 : i32, i32
  }
  func.func @transform_8(%arg0: i32) -> (i32, i32) {
    %c0_i32 = arith.constant 0 : i32
    %c0_i32_0 = arith.constant 0 : i32
    return %arg0, %c0_i32 : i32, i32
  }
  func.func @transform_9(%arg0: i32) -> (i32, i32, i32) {
    %c0_i32 = arith.constant 0 : i32
    %c0_i32_0 = arith.constant 0 : i32
    %c0_i32_1 = arith.constant 0 : i32
    return %arg0, %c0_i32, %c0_i32_0 : i32, i32, i32
  }
}

</mosaic_0001>

<llo_original>
// kernel: slotformer_pos2_forward.1
$region0: #{slotformer_pos2_forward.1}
  #allocation0 [shape = 'u32[]', space=smem, size = 0x4, offset = 0x4, fixed_abs, tag = 'smem constant byte address 0x4 - core index']
  #allocation1 [shape = 'u32[72,128]{1,0:T(1,128)}', space=vmem, size = 0x9000, scoped, tag = 'internal scratch']
  %s0 = inlined_call_operand.vmem [shape: bf16[256,12], index: 0, kind: input, shape index: {}]
  %s1 = inlined_call_operand.vmem [shape: bf16[12,32], index: 1, kind: input, shape index: {}]
  %s2 = inlined_call_operand.vmem [shape: f32[1,32], index: 2, kind: input, shape index: {}]
  %s3 = inlined_call_operand.vmem [shape: bf16[96,32], index: 3, kind: input, shape index: {}]
  %s4 = inlined_call_operand.vmem [shape: f32[1,32], index: 4, kind: input, shape index: {}]
  %s5 = inlined_call_operand.vmem [shape: bf16[32,96], index: 5, kind: input, shape index: {}]
  %s6 = inlined_call_operand.vmem [shape: f32[1,32], index: 6, kind: input, shape index: {}]
  %s7 = inlined_call_operand.vmem [shape: bf16[8,32], index: 7, kind: input, shape index: {}]
  %s8 = inlined_call_operand.vmem [shape: f32[256,32], index: 8, kind: output, shape index: {0}]
  %s9 = inlined_call_operand.vmem [shape: f32[2,9,32], index: 9, kind: output, shape index: {1}]
  %10 = xla_tuple %s8, %s9
  %s11 = sld [smem:[#allocation0]]
  $region73: #{slotformer_pos2_forward.1} parent=0
    _
  %s13 = ssub.s32 1, %s11
  %s14 = scalar_select 0, %s13, %s11
  loop: start=0, step=1, limit=4
  $region2: #{slotformer_pos2_forward.1} parent=0 // loop_pre_header
    _
  $region3: #{slotformer_pos2_forward.1} parent=0 // loop_header
    %s16 = sphi 0, %s20
    %p17 = scmp.ge.s32.totalorder %s16, 4
    %s26 = sphi 0, %s28
    %s29 = sphi 0, %s26
    %s30 = sphi 0, %s29
    %s46 = sphi 0, %s30
    %s50 = sphi 0, %s50
    %s52 = sphi 0, %s50
    %s53 = sphi 0, %s52
    %s67 = sphi 0, %s53
    %s71 = sphi 0, %s71
    %s73 = sphi 0, %s71
    %s74 = sphi 0, %s73
    %s88 = sphi 0, %s74
    %s92 = sphi 0, %s92
    %s94 = sphi 0, %s92
    %s95 = sphi 0, %s94
    %s109 = sphi 0, %s95
    %s113 = sphi 0, %s113
    %s115 = sphi 0, %s113
    %s116 = sphi 0, %s115
    %s130 = sphi 0, %s116
    %s134 = sphi 0, %s134
    %s136 = sphi 0, %s134
    %s137 = sphi 0, %s136
    %s151 = sphi 0, %s137
    %s155 = sphi 0, %s155
    %s157 = sphi 0, %s155
    %s158 = sphi 0, %s157
    %s172 = sphi 0, %s158
    %s176 = sphi 0, %s176
    %s178 = sphi 0, %s176
    %s179 = sphi 0, %s178
    %s193 = sphi 0, %s179
    %s199 = sphi 0, %s201
    %s202 = sphi 0, %s199
    %s203 = sphi 0, %s202
    %s219 = sphi 0, %s203
    %s225 = sphi 0, %s227
    %s228 = sphi 0, %s225
    %s229 = sphi 0, %s228
    %s245 = sphi 0, %s229
  $region4: #{slotformer_pos2_forward.1} parent=0 // loop_header_branch
    %19 = sbr.rel (%p17) target = $region8
  $region5: #{slotformer_pos2_forward.1} parent=0 // loop_body
    %s21 = ssub.s32 %s16, 1
    %s22 = ssub.s32 %s16, 2
    %s23 = sadd.s32 %s16, 1
    %s24 = ssub.s32 %s16, %s23
    %p25 = scmp.eq.s32.totalorder %s24, 0
    %s27 = sadd.s32 %s26, 1
    %s28 = scalar_select %p25, %s26, %s27
    %p31 = pneg %p25
    %p32 = scmp.eq.s32.totalorder %s16, 1
    %p33 = por %p31, %p32
    %p34 = scmp.ne.s32.totalorder %s26, %s29
    %p35 = scmp.eq.s32.totalorder %s16, 0
    %p36 = por %p34, %p35
    %p37 = scmp.ne.s32.totalorder %s26, %s29
    %p38 = scmp.eq.s32.totalorder %s21, 1
    %p39 = por %p37, %p38
    %p40 = scmp.ne.s32.totalorder %s29, %s30
    %p41 = scmp.eq.s32.totalorder %s21, 0
    %p42 = por %p40, %p41
    %p43 = scmp.ne.s32.totalorder %s29, %s30
    %p44 = scmp.eq.s32.totalorder %s22, 1
    %p45 = por %p43, %p44
    %p47 = scmp.ne.s32.totalorder %s30, %s46
    %p48 = scmp.eq.s32.totalorder %s22, 0
    %p49 = por %p47, %p48
    %s51 = sadd.s32 %s50, 1
    %p54 = scmp.eq.s32.totalorder %s16, 1
    %p55 = scmp.ne.s32.totalorder %s50, %s52
    %p56 = scmp.eq.s32.totalorder %s16, 0
    %p57 = por %p55, %p56
    %p58 = scmp.ne.s32.totalorder %s50, %s52
    %p59 = scmp.eq.s32.totalorder %s21, 1
    %p60 = por %p58, %p59
    %p61 = scmp.ne.s32.totalorder %s52, %s53
    %p62 = scmp.eq.s32.totalorder %s21, 0
    %p63 = por %p61, %p62
    %p64 = scmp.ne.s32.totalorder %s52, %s53
    %p65 = scmp.eq.s32.totalorder %s22, 1
    %p66 = por %p64, %p65
    %p68 = scmp.ne.s32.totalorder %s53, %s67
    %p69 = scmp.eq.s32.totalorder %s22, 0
    %p70 = por %p68, %p69
    %s72 = sadd.s32 %s71, 1
    %p75 = scmp.eq.s32.totalorder %s16, 1
    %p76 = scmp.ne.s32.totalorder %s71, %s73
    %p77 = scmp.eq.s32.totalorder %s16, 0
    %p78 = por %p76, %p77
    %p79 = scmp.ne.s32.totalorder %s71, %s73
    %p80 = scmp.eq.s32.totalorder %s21, 1
    %p81 = por %p79, %p80
    %p82 = scmp.ne.s32.totalorder %s73, %s74
    %p83 = scmp.eq.s32.totalorder %s21, 0
    %p84 = por %p82, %p83
    %p85 = scmp.ne.s32.totalorder %s73, %s74
    %p86 = scmp.eq.s32.totalorder %s22, 1
    %p87 = por %p85, %p86
    %p89 = scmp.ne.s32.totalorder %s74, %s88
    %p90 = scmp.eq.s32.totalorder %s22, 0
    %p91 = por %p89, %p90
    %s93 = sadd.s32 %s92, 1
    %p96 = scmp.eq.s32.totalorder %s16, 1
    %p97 = scmp.ne.s32.totalorder %s92, %s94
    %p98 = scmp.eq.s32.totalorder %s16, 0
    %p99 = por %p97, %p98
    %p100 = scmp.ne.s32.totalorder %s92, %s94
    %p101 = scmp.eq.s32.totalorder %s21, 1
    %p102 = por %p100, %p101
    %p103 = scmp.ne.s32.totalorder %s94, %s95
    %p104 = scmp.eq.s32.totalorder %s21, 0
    %p105 = por %p103, %p104
    %p106 = scmp.ne.s32.totalorder %s94, %s95
    %p107 = scmp.eq.s32.totalorder %s22, 1
    %p108 = por %p106, %p107
    %p110 = scmp.ne.s32.totalorder %s95, %s109
    %p111 = scmp.eq.s32.totalorder %s22, 0
    %p112 = por %p110, %p111
    %s114 = sadd.s32 %s113, 1
    %p117 = scmp.eq.s32.totalorder %s16, 1
    %p118 = scmp.ne.s32.totalorder %s113, %s115
    %p119 = scmp.eq.s32.totalorder %s16, 0
    %p120 = por %p118, %p119
    %p121 = scmp.ne.s32.totalorder %s113, %s115
    %p122 = scmp.eq.s32.totalorder %s21, 1
    %p123 = por %p121, %p122
    %p124 = scmp.ne.s32.totalorder %s115, %s116
    %p125 = scmp.eq.s32.totalorder %s21, 0
    %p126 = por %p124, %p125
    %p127 = scmp.ne.s32.totalorder %s115, %s116
    %p128 = scmp.eq.s32.totalorder %s22, 1
    %p129 = por %p127, %p128
    %p131 = scmp.ne.s32.totalorder %s116, %s130
    %p132 = scmp.eq.s32.totalorder %s22, 0
    %p133 = por %p131, %p132
    %s135 = sadd.s32 %s134, 1
    %p138 = scmp.eq.s32.totalorder %s16, 1
    %p139 = scmp.ne.s32.totalorder %s134, %s136
    %p140 = scmp.eq.s32.totalorder %s16, 0
    %p141 = por %p139, %p140
    %p142 = scmp.ne.s32.totalorder %s134, %s136
    %p143 = scmp.eq.s32.totalorder %s21, 1
    %p144 = por %p142, %p143
    %p145 = scmp.ne.s32.totalorder %s136, %s137
    %p146 = scmp.eq.s32.totalorder %s21, 0
    %p147 = por %p145, %p146
    %p148 = scmp.ne.s32.totalorder %s136, %s137
    %p149 = scmp.eq.s32.totalorder %s22, 1
    %p150 = por %p148, %p149
    %p152 = scmp.ne.s32.totalorder %s137, %s151
    %p153 = scmp.eq.s32.totalorder %s22, 0
    %p154 = por %p152, %p153
    %s156 = sadd.s32 %s155, 1
    %p159 = scmp.eq.s32.totalorder %s16, 1
    %p160 = scmp.ne.s32.totalorder %s155, %s157
    %p161 = scmp.eq.s32.totalorder %s16, 0
    %p162 = por %p160, %p161
    %p163 = scmp.ne.s32.totalorder %s155, %s157
    %p164 = scmp.eq.s32.totalorder %s21, 1
    %p165 = por %p163, %p164
    %p166 = scmp.ne.s32.totalorder %s157, %s158
    %p167 = scmp.eq.s32.totalorder %s21, 0
    %p168 = por %p166, %p167
    %p169 = scmp.ne.s32.totalorder %s157, %s158
    %p170 = scmp.eq.s32.totalorder %s22, 1
    %p171 = por %p169, %p170
    %p173 = scmp.ne.s32.totalorder %s158, %s172
    %p174 = scmp.eq.s32.totalorder %s22, 0
    %p175 = por %p173, %p174
    %s177 = sadd.s32 %s176, 1
    %p180 = scmp.eq.s32.totalorder %s16, 1
    %p181 = scmp.ne.s32.totalorder %s176, %s178
    %p182 = scmp.eq.s32.totalorder %s16, 0
    %p183 = por %p181, %p182
    %p184 = scmp.ne.s32.totalorder %s176, %s178
    %p185 = scmp.eq.s32.totalorder %s21, 1
    %p186 = por %p184, %p185
    %p187 = scmp.ne.s32.totalorder %s178, %s179
    %p188 = scmp.eq.s32.totalorder %s21, 0
    %p189 = por %p187, %p188
    %p190 = scmp.ne.s32.totalorder %s178, %s179
    %p191 = scmp.eq.s32.totalorder %s22, 1
    %p192 = por %p190, %p191
    %p194 = scmp.ne.s32.totalorder %s179, %s193
    %p195 = scmp.eq.s32.totalorder %s22, 0
    %p196 = por %p194, %p195
    %s197 = ssub.s32 %s16, %s23
    %p198 = scmp.eq.s32.totalorder %s197, 0
    %s200 = sadd.s32 %s199, 1
    %s201 = scalar_select %p198, %s199, %s200
    %p204 = pneg %p198
    %p205 = scmp.eq.s32.totalorder %s16, 1
    %p206 = por %p204, %p205
    %p207 = scmp.ne.s32.totalorder %s199, %s202
    %p208 = scmp.eq.s32.totalorder %s16, 0
    %p209 = por %p207, %p208
    %p210 = scmp.ne.s32.totalorder %s199, %s202
    %p211 = scmp.eq.s32.totalorder %s21, 1
    %p212 = por %p210, %p211
    %p213 = scmp.ne.s32.totalorder %s202, %s203
    %p214 = scmp.eq.s32.totalorder %s21, 0
    %p215 = por %p213, %p214
    %p216 = scmp.ne.s32.totalorder %s202, %s203
    %p217 = scmp.eq.s32.totalorder %s22, 1
    %p218 = por %p216, %p217
    %p220 = scmp.ne.s32.totalorder %s203, %s219
    %p221 = scmp.eq.s32.totalorder %s22, 0
    %p222 = por %p220, %p221
    %s223 = ssub.s32 %s16, %s23
    %p224 = scmp.eq.s32.totalorder %s223, 0
    %s226 = sadd.s32 %s225, 1
    %s227 = scalar_select %p224, %s225, %s226
    %p230 = pneg %p224
    %p231 = scmp.eq.s32.totalorder %s16, 1
    %p232 = por %p230, %p231
    %p233 = scmp.ne.s32.totalorder %s225, %s228
    %p234 = scmp.eq.s32.totalorder %s16, 0
    %p235 = por %p233, %p234
    %p236 = scmp.ne.s32.totalorder %s225, %s228
    %p237 = scmp.eq.s32.totalorder %s21, 1
    %p238 = por %p236, %p237
    %p239 = scmp.ne.s32.totalorder %s228, %s229
    %p240 = scmp.eq.s32.totalorder %s21, 0
    %p241 = por %p239, %p240
    %p242 = scmp.ne.s32.totalorder %s228, %s229
    %p243 = scmp.eq.s32.totalorder %s22, 1
    %p244 = por %p242, %p243
    %p246 = scmp.ne.s32.totalorder %s229, %s245
    %p247 = scmp.eq.s32.totalorder %s22, 0
    %p248 = por %p246, %p247
    %p249 = scmp.le.s32.totalorder 1, %s16
    %p250 = scmp.lt.s32.totalorder %s16, 3
    %p251 = pnand %p249, %p250
    %p252 = pneg %p251
    // Predicated region
    $region9: #{slotformer_pos2_forward.1} parent=5 // pred_check
      _
    $region10: #{slotformer_pos2_forward.1} parent=5 // pred_check_branch
      %254 = sbr.rel (%p251) target = $region12
    $region11: #{slotformer_pos2_forward.1} parent=5 // pred_region
      %s255 = ssub.s32 %s16, 1
      // Predicated region
      $region13: #{slotformer_pos2_forward.1} parent=11 // pred_check
        %p256 = pneg %p63
      $region14: #{slotformer_pos2_forward.1} parent=11 // pred_check_branch
        %258 = sbr.rel (%p256) target = $region16
      $region15: #{slotformer_pos2_forward.1} parent=11 // pred_region
        _
      $region16: #{slotformer_pos2_forward.1} parent=11 // pred_fallthru
        _
      // Predicated region
      $region17: #{slotformer_pos2_forward.1} parent=11 // pred_check
        %p259 = pneg %p84
      $region18: #{slotformer_pos2_forward.1} parent=11 // pred_check_branch
        %261 = sbr.rel (%p259) target = $region20
      $region19: #{slotformer_pos2_forward.1} parent=11 // pred_region
        _
      $region20: #{slotformer_pos2_forward.1} parent=11 // pred_fallthru
        _
      // Predicated region
      $region21: #{slotformer_pos2_forward.1} parent=11 // pred_check
        %p262 = pneg %p105
      $region22: #{slotformer_pos2_forward.1} parent=11 // pred_check_branch
        %264 = sbr.rel (%p262) target = $region24
      $region23: #{slotformer_pos2_forward.1} parent=11 // pred_region
        _
      $region24: #{slotformer_pos2_forward.1} parent=11 // pred_fallthru
        _
      // Predicated region
      $region25: #{slotformer_pos2_forward.1} parent=11 // pred_check
        %p265 = pneg %p126
      $region26: #{slotformer_pos2_forward.1} parent=11 // pred_check_branch
        %267 = sbr.rel (%p265) target = $region28
      $region27: #{slotformer_pos2_forward.1} parent=11 // pred_region
        _
      $region28: #{slotformer_pos2_forward.1} parent=11 // pred_fallthru
        _
      // Predicated region
      $region29: #{slotformer_pos2_forward.1} parent=11 // pred_check
        %p268 = pneg %p147
      $region30: #{slotformer_pos2_forward.1} parent=11 // pred_check_branch
        %270 = sbr.rel (%p268) target = $region32
      $region31: #{slotformer_pos2_forward.1} parent=11 // pred_region
        _
      $region32: #{slotformer_pos2_forward.1} parent=11 // pred_fallthru
        _
      // Predicated region
      $region33: #{slotformer_pos2_forward.1} parent=11 // pred_check
        %p271 = pneg %p168
      $region34: #{slotformer_pos2_forward.1} parent=11 // pred_check_branch
        %273 = sbr.rel (%p271) target = $region36
      $region35: #{slotformer_pos2_forward.1} parent=11 // pred_region
        _
      $region36: #{slotformer_pos2_forward.1} parent=11 // pred_fallthru
        _
      // Predicated region
      $region37: #{slotformer_pos2_forward.1} parent=11 // pred_check
        %p274 = pneg %p189
      $region38: #{slotformer_pos2_forward.1} parent=11 // pred_check_branch
        %276 = sbr.rel (%p274) target = $region40
      $region39: #{slotformer_pos2_forward.1} parent=11 // pred_region
        _
      $region40: #{slotformer_pos2_forward.1} parent=11 // pred_fallthru
        _
    $region12: #{slotformer_pos2_forward.1} parent=5 // pred_fallthru
      _
    %p277 = scmp.lt.s32.totalorder %s16, 2
    // Predicated region
    $region41: #{slotformer_pos2_forward.1} parent=5 // pred_check
      %p278 = pneg %p277
    $region42: #{slotformer_pos2_forward.1} parent=5 // pred_check_branch
      %280 = sbr.rel (%p278) target = $region44
    $region43: #{slotformer_pos2_forward.1} parent=5 // pred_region
      // Predicated region
      $region45: #{slotformer_pos2_forward.1} parent=43 // pred_check
        %p281 = pneg %p36
      $region46: #{slotformer_pos2_forward.1} parent=43 // pred_check_branch
        %283 = sbr.rel (%p281) target = $region48
      $region47: #{slotformer_pos2_forward.1} parent=43 // pred_region
        %s284 = smul.u32 16, %s16
        %p285 = scmp.lt.s32.totalorder %s284, 31
        %s286 = scalar_select %p285, %s284, 31
        %s287 = smul.addr %s286, 4
        %s288 = scalar_lea.vmem %s0, %s287
        %s289 = smul.u32 16, %s16
      $region48: #{slotformer_pos2_forward.1} parent=43 // pred_fallthru
        _
    $region44: #{slotformer_pos2_forward.1} parent=5 // pred_fallthru
      _
    %p290 = scmp.le.s32.totalorder 1, %s16
    %p291 = scmp.lt.s32.totalorder %s16, 3
    %p292 = pnand %p290, %p291
    %p293 = pneg %p292
    // Predicated region
    $region49: #{slotformer_pos2_forward.1} parent=5 // pred_check
      _
    $region50: #{slotformer_pos2_forward.1} parent=5 // pred_check_branch
      %295 = sbr.rel (%p292) target = $region52
    $region51: #{slotformer_pos2_forward.1} parent=5 // pred_region
      %s296 = ssub.s32 %s16, 1
      %s297 = smul.u32 16, %s21
      %p298 = scmp.lt.s32.totalorder %s297, 31
      %s299 = scalar_select %p298, %s297, 31
      %s300 = smul.addr %s299, 4
      %s301 = scalar_lea.vmem %s0, %s300
      %p302 = pneg %p42
      %p303 = pneg %p39
      %p304 = pneg %p63
      %p305 = pneg %p60
      %p306 = pneg %p84
      %p307 = pneg %p81
      %p308 = pneg %p105
      %p309 = pneg %p102
      %p310 = pneg %p126
      %p311 = pneg %p123
      %p312 = pneg %p147
      %p313 = pneg %p144
      %p314 = pneg %p168
      %p315 = pneg %p165
      %p316 = pneg %p189
      %p317 = pneg %p186
      %p318 = pneg %p215
      %p319 = pneg %p212
      %s320 = smul.u32 16, %s21
      %p321 = scmp.lt.s32.totalorder %s320, 31
      %s322 = scalar_select %p321, %s320, 31
      %s323 = smul.addr %s322, 8
      %s324 = scalar_lea.vmem %s8, %s323
      %p325 = pneg %p241
      %p326 = pneg %p238
      %p327 = scmp.lt.s32.totalorder %s21, 1
      %s328 = scalar_select %p327, %s21, 1
      %s329 = smul.addr %s328, 2
      %s330 = smul.addr %s329, 8
      %s331 = scalar_lea.vmem %s9, %s330
      %s332 = smul.u32 16, %s21
      %p333 = scmp.lt.s32.totalorder %s332, 31
      %s334 = scalar_select %p333, %s332, 31
      %s335 = smul.addr %s334, 4
      %s336 = scalar_lea.vmem %s0, %s335
      %s337 = smul.u32 16, %s21
      %s338 = smul.u32 16, %s21
      %p339 = scmp.lt.s32.totalorder %s338, 31
      %s340 = scalar_select %p339, %s338, 31
      %s341 = smul.addr %s340, 8
      %s342 = scalar_lea.vmem %s8, %s341
      %s343 = smul.u32 16, %s21
      %p344 = scmp.lt.s32.totalorder %s21, 1
      %s345 = scalar_select %p344, %s21, 1
      %s346 = smul.addr %s345, 2
      %s347 = smul.addr %s346, 8
      %s348 = scalar_lea.vmem %s9, %s347
      %v350 = vld [vmem:[%s336] sm:$0xf]
      %v351 = vld [vmem:[%s336 + $0x4] sm:$0xf]
      %v352 = vld [vmem:[%s336 + $0x8] sm:$0xf]
      %v353 = vld [vmem:[%s336 + $0xc] sm:$0xf]
      %v354 = vld [vmem:[%s336 + $0x10] sm:$0xf]
      %v355 = vld [vmem:[%s336 + $0x14] sm:$0xf]
      %v356 = vld [vmem:[%s336 + $0x18] sm:$0xf]
      %v357 = vld [vmem:[%s336 + $0x1c] sm:$0xf]
      %v358 = vld [vmem:[%s336 + $0x20] sm:$0xf]
      %v359 = vld [vmem:[%s336 + $0x24] sm:$0xf]
      %v360 = vld [vmem:[%s336 + $0x28] sm:$0xf]
      %v361 = vld [vmem:[%s336 + $0x2c] sm:$0xf]
      %v362 = vld [vmem:[%s336 + $0x30] sm:$0xf]
      %v363 = vld [vmem:[%s336 + $0x34] sm:$0xf]
      %v364 = vld [vmem:[%s336 + $0x38] sm:$0xf]
      %v365 = vld [vmem:[%s336 + $0x3c] sm:$0xf]
      %v366 = vld [vmem:[%s1] sm:$0xf]
      %v367 = vld [vmem:[%s1 + $0x4] sm:$0x3]
      %v368 = vld [vmem:[%s2] sm:$0x1]
      %v370 = vperm.slane %v368, 0
      %v388 = vunpack.c.l.b16 %v350
      %v389 = vunpack.c.l.b16 %v351
      %v390 = vunpack.c.l.b16 %v352
      %v391 = vunpack.c.l.b16 %v353
      %v392 = vunpack.c.l.b16 %v354
      %v393 = vunpack.c.l.b16 %v355
      %v394 = vunpack.c.l.b16 %v356
      %v395 = vunpack.c.l.b16 %v357
      %v396 = vunpack.c.l.b16 %v358
      %v397 = vunpack.c.l.b16 %v359
      %v398 = vunpack.c.l.b16 %v360
      %v399 = vunpack.c.l.b16 %v361
      %v400 = vunpack.c.l.b16 %v362
      %v401 = vunpack.c.l.b16 %v363
      %v402 = vunpack.c.l.b16 %v364
      %v403 = vunpack.c.l.b16 %v365
      %v404 = vpack.c.b16 %v389, %v388
      %v405 = vpack.c.b16 %v391, %v390
      %v406 = vpack.c.b16 %v393, %v392
      %v407 = vpack.c.b16 %v395, %v394
      %v408 = vpack.c.b16 %v397, %v396
      %v409 = vpack.c.b16 %v399, %v398
      %v410 = vpack.c.b16 %v401, %v400
      %v411 = vpack.c.b16 %v403, %v402
      %v414 = vunpack.c.l.b16 %v366
      %v415 = vunpack.c.l.b16 %v367
      %v416 = vpack.c.b16 %v415, %v414
      %vm417 = vcmask 97280
      %v419 = vsel %vm417, %v404, 0
      %v422 = vsel %vm417, %v405, 0
      %v425 = vsel %vm417, %v406, 0
      %v428 = vsel %vm417, %v407, 0
      %v431 = vsel %vm417, %v408, 0
      %v434 = vsel %vm417, %v409, 0
      %v437 = vsel %vm417, %v410, 0
      %v440 = vsel %vm417, %v411, 0
      %vm442 = vcmask 1045504
      %v444 = vsel %vm442, %v416, 0
      %446 = vmatpush.bf16.msra.mxu0 0
      %447 = vmatpush.bf16.msra.mxu0 0
      %448 = vmatpush.bf16.msra.mxu0 0
      %449 = vmatpush.bf16.msra.mxu0 0
      %450 = vmatpush.bf16.msra.mxu0 0
      %451 = vmatpush.bf16.msra.mxu0 0
      %452 = vmatpush.bf16.msra.mxu0 0
      %453 = vmatpush.bf16.msra.mxu0 %v444
      %454 = vmatmul.bf16.gmra.mxu0 %v419
      %v455 = vpop.f32.mrf.mxu0
      %v456 = vadd.f32 %v370, %v455
      %v457 = vpop.f32.mrf.mxu0
      %v458 = vadd.f32 %v370, %v457
      %459 = vmatmul.bf16.gmra.mxu0 %v422
      %v460 = vpop.f32.mrf.mxu0
      %v461 = vadd.f32 %v370, %v460
      %v462 = vpop.f32.mrf.mxu0
      %v463 = vadd.f32 %v370, %v462
      %464 = vmatmul.bf16.gmra.mxu0 %v425
      %v465 = vpop.f32.mrf.mxu0
      %v466 = vadd.f32 %v370, %v465
      %v467 = vpop.f32.mrf.mxu0
      %v468 = vadd.f32 %v370, %v467
      %469 = vmatmul.bf16.gmra.mxu0 %v428
      %v470 = vpop.f32.mrf.mxu0
      %v471 = vadd.f32 %v370, %v470
      %v472 = vpop.f32.mrf.mxu0
      %v473 = vadd.f32 %v370, %v472
      %474 = vmatmul.bf16.gmra.mxu0 %v431
      %v475 = vpop.f32.mrf.mxu0
      %v476 = vadd.f32 %v370, %v475
      %v477 = vpop.f32.mrf.mxu0
      %v478 = vadd.f32 %v370, %v477
      %479 = vmatmul.bf16.gmra.mxu0 %v434
      %v480 = vpop.f32.mrf.mxu0
      %v481 = vadd.f32 %v370, %v480
      %v482 = vpop.f32.mrf.mxu0
      %v483 = vadd.f32 %v370, %v482
      %484 = vmatmul.bf16.gmra.mxu0 %v437
      %v485 = vpop.f32.mrf.mxu0
      %v486 = vadd.f32 %v370, %v485
      %v487 = vpop.f32.mrf.mxu0
      %v488 = vadd.f32 %v370, %v487
      %489 = vmatmul.bf16.gmra.mxu0 %v440
      %v490 = vpop.f32.mrf.mxu0
      %v491 = vadd.f32 %v370, %v490
      %v492 = vpop.f32.mrf.mxu0
      %v493 = vadd.f32 %v370, %v492
      %494 = vdwg.mxu0
      %v495 = vmax.f32 %v456, 0.0
      %v496 = vmax.f32 %v458, 0.0
      %v497 = vmax.f32 %v461, 0.0
      %v498 = vmax.f32 %v463, 0.0
      %v499 = vmax.f32 %v466, 0.0
      %v500 = vmax.f32 %v468, 0.0
      %v501 = vmax.f32 %v471, 0.0
      %v502 = vmax.f32 %v473, 0.0
      %v503 = vmax.f32 %v476, 0.0
      %v504 = vmax.f32 %v478, 0.0
      %v505 = vmax.f32 %v481, 0.0
      %v506 = vmax.f32 %v483, 0.0
      %v507 = vmax.f32 %v486, 0.0
      %v508 = vmax.f32 %v488, 0.0
      %v509 = vmax.f32 %v491, 0.0
      %v510 = vmax.f32 %v493, 0.0
      %v511 = vlaneseq
      %v512 = vshrl.u32 %v511, 7
      %v513 = vadd.s32 %v512, 8
      %v514 = vadd.s32 %v512, 16
      %v515 = vadd.s32 %v512, 24
      %v516 = vadd.s32 %v512, 32
      %v517 = vadd.s32 %v512, 40
      %v518 = vadd.s32 %v512, 48
      %v519 = vadd.s32 %v512, 56
      %v520 = vadd.s32 %v512, 64
      %v521 = vadd.s32 %v512, 72
      %v522 = vadd.s32 %v512, 80
      %v523 = vadd.s32 %v512, 88
      %v524 = vadd.s32 %v512, 96
      %v525 = vadd.s32 %v512, 104
      %v526 = vadd.s32 %v512, 112
      %v527 = vadd.s32 %v512, 120
      %vm528 = vcmp.lt.s32.totalorder %v512, 0
      %v529 = vsub.s32 0, %v512
      %v530 = vsel %vm528, %v529, %v512
      %v531 = vshrl.u32 %v530, 7
      %v532 = vand.u32 %v530, 127
      %v533 = vsub.s32 0, %v532
      %v534 = vsel %vm528, %v533, %v532
      %vm535 = vcmp.lt.s32.totalorder %v513, 0
      %v536 = vsub.s32 0, %v513
      %v537 = vsel %vm535, %v536, %v513
      %v538 = vshrl.u32 %v537, 7
      %v539 = vand.u32 %v537, 127
      %v540 = vsub.s32 0, %v539
      %v541 = vsel %vm535, %v540, %v539
      %vm542 = vcmp.lt.s32.totalorder %v514, 0
      %v543 = vsub.s32 0, %v514
      %v544 = vsel %vm542, %v543, %v514
      %v545 = vshrl.u32 %v544, 7
      %v546 = vand.u32 %v544, 127
      %v547 = vsub.s32 0, %v546
      %v548 = vsel %vm542, %v547, %v546
      %vm549 = vcmp.lt.s32.totalorder %v515, 0
      %v550 = vsub.s32 0, %v515
      %v551 = vsel %vm549, %v550, %v515
      %v552 = vshrl.u32 %v551, 7
      %v553 = vand.u32 %v551, 127
      %v554 = vsub.s32 0, %v553
      %v555 = vsel %vm549, %v554, %v553
      %vm556 = vcmp.lt.s32.totalorder %v516, 0
      %v557 = vsub.s32 0, %v516
      %v558 = vsel %vm556, %v557, %v516
      %v559 = vshrl.u32 %v558, 7
      %v560 = vand.u32 %v558, 127
      %v561 = vsub.s32 0, %v560
      %v562 = vsel %vm556, %v561, %v560
      %vm563 = vcmp.lt.s32.totalorder %v517, 0
      %v564 = vsub.s32 0, %v517
      %v565 = vsel %vm563, %v564, %v517
      %v566 = vshrl.u32 %v565, 7
      %v567 = vand.u32 %v565, 127
      %v568 = vsub.s32 0, %v567
      %v569 = vsel %vm563, %v568, %v567
      %vm570 = vcmp.lt.s32.totalorder %v518, 0
      %v571 = vsub.s32 0, %v518
      %v572 = vsel %vm570, %v571, %v518
      %v573 = vshrl.u32 %v572, 7
      %v574 = vand.u32 %v572, 127
      %v575 = vsub.s32 0, %v574
      %v576 = vsel %vm570, %v575, %v574
      %vm577 = vcmp.lt.s32.totalorder %v519, 0
      %v578 = vsub.s32 0, %v519
      %v579 = vsel %vm577, %v578, %v519
      %v580 = vshrl.u32 %v579, 7
      %v581 = vand.u32 %v579, 127
      %v582 = vsub.s32 0, %v581
      %v583 = vsel %vm577, %v582, %v581
      %vm584 = vcmp.lt.s32.totalorder %v520, 0
      %v585 = vsub.s32 0, %v520
      %v586 = vsel %vm584, %v585, %v520
      %v587 = vshrl.u32 %v586, 7
      %v588 = vand.u32 %v586, 127
      %v589 = vsub.s32 0, %v588
      %v590 = vsel %vm584, %v589, %v588
      %vm591 = vcmp.lt.s32.totalorder %v521, 0
      %v592 = vsub.s32 0, %v521
      %v593 = vsel %vm591, %v592, %v521
      %v594 = vshrl.u32 %v593, 7
      %v595 = vand.u32 %v593, 127
      %v596 = vsub.s32 0, %v595
      %v597 = vsel %vm591, %v596, %v595
      %vm598 = vcmp.lt.s32.totalorder %v522, 0
      %v599 = vsub.s32 0, %v522
      %v600 = vsel %vm598, %v599, %v522
      %v601 = vshrl.u32 %v600, 7
      %v602 = vand.u32 %v600, 127
      %v603 = vsub.s32 0, %v602
      %v604 = vsel %vm598, %v603, %v602
      %vm605 = vcmp.lt.s32.totalorder %v523, 0
      %v606 = vsub.s32 0, %v523
      %v607 = vsel %vm605, %v606, %v523
      %v608 = vshrl.u32 %v607, 7
      %v609 = vand.u32 %v607, 127
      %v610 = vsub.s32 0, %v609
      %v611 = vsel %vm605, %v610, %v609
      %vm612 = vcmp.lt.s32.totalorder %v524, 0
      %v613 = vsub.s32 0, %v524
      %v614 = vsel %vm612, %v613, %v524
      %v615 = vshrl.u32 %v614, 7
      %v616 = vand.u32 %v614, 127
      %v617 = vsub.s32 0, %v616
      %v618 = vsel %vm612, %v617, %v616
      %vm619 = vcmp.lt.s32.totalorder %v525, 0
      %v620 = vsub.s32 0, %v525
      %v621 = vsel %vm619, %v620, %v525
      %v622 = vshrl.u32 %v621, 7
      %v623 = vand.u32 %v621, 127
      %v624 = vsub.s32 0, %v623
      %v625 = vsel %vm619, %v624, %v623
      %vm626 = vcmp.lt.s32.totalorder %v526, 0
      %v627 = vsub.s32 0, %v526
      %v628 = vsel %vm626, %v627, %v526
      %v629 = vshrl.u32 %v628, 7
      %v630 = vand.u32 %v628, 127
      %v631 = vsub.s32 0, %v630
      %v632 = vsel %vm626, %v631, %v630
      %vm633 = vcmp.lt.s32.totalorder %v527, 0
      %v634 = vsub.s32 0, %v527
      %v635 = vsel %vm633, %v634, %v527
      %v636 = vshrl.u32 %v635, 7
      %v637 = vand.u32 %v635, 127
      %v638 = vsub.s32 0, %v637
      %v639 = vsel %vm633, %v638, %v637
      %vm640 = vcmp.ne.s32.totalorder %v534, 0
      %vm641 = vcmp.ne.s32.totalorder %v541, 0
      %vm642 = vcmp.ne.s32.totalorder %v548, 0
      %vm643 = vcmp.ne.s32.totalorder %v555, 0
      %vm644 = vcmp.ne.s32.totalorder %v562, 0
      %vm645 = vcmp.ne.s32.totalorder %v569, 0
      %vm646 = vcmp.ne.s32.totalorder %v576, 0
      %vm647 = vcmp.ne.s32.totalorder %v583, 0
      %vm648 = vcmp.ne.s32.totalorder %v590, 0
      %vm649 = vcmp.ne.s32.totalorder %v597, 0
      %vm650 = vcmp.ne.s32.totalorder %v604, 0
      %vm651 = vcmp.ne.s32.totalorder %v611, 0
      %vm652 = vcmp.ne.s32.totalorder %v618, 0
      %vm653 = vcmp.ne.s32.totalorder %v625, 0
      %vm654 = vcmp.ne.s32.totalorder %v632, 0
      %vm655 = vcmp.ne.s32.totalorder %v639, 0
      %vm656 = vcmp.lt.s32.totalorder %v534, 0
      %vm657 = vcmp.lt.s32.totalorder %v541, 0
      %vm658 = vcmp.lt.s32.totalorder %v548, 0
      %vm659 = vcmp.lt.s32.totalorder %v555, 0
      %vm660 = vcmp.lt.s32.totalorder %v562, 0
      %vm661 = vcmp.lt.s32.totalorder %v569, 0
      %vm662 = vcmp.lt.s32.totalorder %v576, 0
      %vm663 = vcmp.lt.s32.totalorder %v583, 0
      %vm664 = vcmp.lt.s32.totalorder %v590, 0
      %vm665 = vcmp.lt.s32.totalorder %v597, 0
      %vm666 = vcmp.lt.s32.totalorder %v604, 0
      %vm667 = vcmp.lt.s32.totalorder %v611, 0
      %vm668 = vcmp.lt.s32.totalorder %v618, 0
      %vm669 = vcmp.lt.s32.totalorder %v625, 0
      %vm670 = vcmp.lt.s32.totalorder %v632, 0
      %vm671 = vcmp.lt.s32.totalorder %v639, 0
      %vm672 = vmand %vm656, %vm640
      %vm673 = vmand %vm657, %vm641
      %vm674 = vmand %vm658, %vm642
      %vm675 = vmand %vm659, %vm643
      %vm676 = vmand %vm660, %vm644
      %vm677 = vmand %vm661, %vm645
      %vm678 = vmand %vm662, %vm646
      %vm679 = vmand %vm663, %vm647
      %vm680 = vmand %vm664, %vm648
      %vm681 = vmand %vm665, %vm649
      %vm682 = vmand %vm666, %vm650
      %vm683 = vmand %vm667, %vm651
      %vm684 = vmand %vm668, %vm652
      %vm685 = vmand %vm669, %vm653
      %vm686 = vmand %vm670, %vm654
      %vm687 = vmand %vm671, %vm655
      %v688 = vadd.s32 %v534, 128
      %v689 = vadd.s32 %v541, 128
      %v690 = vadd.s32 %v548, 128
      %v691 = vadd.s32 %v555, 128
      %v692 = vadd.s32 %v562, 128
      %v693 = vadd.s32 %v569, 128
      %v694 = vadd.s32 %v576, 128
      %v695 = vadd.s32 %v583, 128
      %v696 = vadd.s32 %v590, 128
      %v697 = vadd.s32 %v597, 128
      %v698 = vadd.s32 %v604, 128
      %v699 = vadd.s32 %v611, 128
      %v700 = vadd.s32 %v618, 128
      %v701 = vadd.s32 %v625, 128
      %v702 = vadd.s32 %v632, 128
      %v703 = vadd.s32 %v639, 128
      %v704 = vsel %vm672, %v688, %v534
      %v705 = vsel %vm673, %v689, %v541
      %v706 = vsel %vm674, %v690, %v548
      %v707 = vsel %vm675, %v691, %v555
      %v708 = vsel %vm676, %v692, %v562
      %v709 = vsel %vm677, %v693, %v569
      %v710 = vsel %vm678, %v694, %v576
      %v711 = vsel %vm679, %v695, %v583
      %v712 = vsel %vm680, %v696, %v590
      %v713 = vsel %vm681, %v697, %v597
      %v714 = vsel %vm682, %v698, %v604
      %v715 = vsel %vm683, %v699, %v611
      %v716 = vsel %vm684, %v700, %v618
      %v717 = vsel %vm685, %v701, %v625
      %v718 = vsel %vm686, %v702, %v632
      %v719 = vsel %vm687, %v703, %v639
      %vm720 = vcmp.eq.s32.totalorder %v704, 0
      %vm721 = vcmp.eq.s32.totalorder %v705, 0
      %vm722 = vcmp.eq.s32.totalorder %v706, 0
      %vm723 = vcmp.eq.s32.totalorder %v707, 0
      %vm724 = vcmp.eq.s32.totalorder %v708, 0
      %vm725 = vcmp.eq.s32.totalorder %v709, 0
      %vm726 = vcmp.eq.s32.totalorder %v710, 0
      %vm727 = vcmp.eq.s32.totalorder %v711, 0
      %vm728 = vcmp.eq.s32.totalorder %v712, 0
      %vm729 = vcmp.eq.s32.totalorder %v713, 0
      %vm730 = vcmp.eq.s32.totalorder %v714, 0
      %vm731 = vcmp.eq.s32.totalorder %v715, 0
      %vm732 = vcmp.eq.s32.totalorder %v716, 0
      %vm733 = vcmp.eq.s32.totalorder %v717, 0
      %vm734 = vcmp.eq.s32.totalorder %v718, 0
      %vm735 = vcmp.eq.s32.totalorder %v719, 0
      %v736 = vrot.slane %v495, 7
      %v737 = vrot.slane %v496, 7
      %v738 = vrot.slane %v497, 7
      %v739 = vrot.slane %v498, 7
      %v740 = vrot.slane %v499, 7
      %v741 = vrot.slane %v500, 7
      %v742 = vrot.slane %v501, 7
      %v743 = vrot.slane %v502, 7
      %v744 = vrot.slane %v503, 7
      %v745 = vrot.slane %v504, 7
      %v746 = vrot.slane %v505, 7
      %v747 = vrot.slane %v506, 7
      %v748 = vrot.slane %v507, 7
      %v749 = vrot.slane %v508, 7
      %v750 = vrot.slane %v509, 7
      %v751 = vrot.slane %v510, 7
      %vm752 = vcmp.lt.s32.totalorder %v512, 1
      %v753 = vsel %vm752, %v750, %v751
      %v754 = vsel %vm752, %v749, %v750
      %v755 = vsel %vm752, %v748, %v749
      %v756 = vsel %vm752, %v747, %v748
      %v757 = vsel %vm752, %v746, %v747
      %v758 = vsel %vm752, %v745, %v746
      %v759 = vsel %vm752, %v744, %v745
      %v760 = vsel %vm752, %v743, %v744
      %v761 = vsel %vm752, %v742, %v743
      %v762 = vsel %vm752, %v741, %v742
      %v763 = vsel %vm752, %v740, %v741
      %v764 = vsel %vm752, %v739, %v740
      %v765 = vsel %vm752, %v738, %v739
      %v766 = vsel %vm752, %v737, %v738
      %v767 = vsel %vm752, %v736, %v737
      %v768 = vsel %vm752, %v751, %v736
      %v769 = vsel %vm720, 0.0, %v768
      %v770 = vsel %vm721, 0.0, %v767
      %v771 = vsel %vm722, 0.0, %v766
      %v772 = vsel %vm723, 0.0, %v765
      %v773 = vsel %vm724, 0.0, %v764
      %v774 = vsel %vm725, 0.0, %v763
      %v775 = vsel %vm726, 0.0, %v762
      %v776 = vsel %vm727, 0.0, %v761
      %v777 = vsel %vm728, 0.0, %v760
      %v778 = vsel %vm729, 0.0, %v759
      %v779 = vsel %vm730, 0.0, %v758
      %v780 = vsel %vm731, 0.0, %v757
      %v781 = vsel %vm732, 0.0, %v756
      %v782 = vsel %vm733, 0.0, %v755
      %v783 = vsel %vm734, 0.0, %v754
      %v784 = vsel %vm735, 0.0, %v753
      %vm785 = vcmp.eq.s32.totalorder %v704, 127
      %vm786 = vcmp.eq.s32.totalorder %v705, 127
      %vm787 = vcmp.eq.s32.totalorder %v706, 127
      %vm788 = vcmp.eq.s32.totalorder %v707, 127
      %vm789 = vcmp.eq.s32.totalorder %v708, 127
      %vm790 = vcmp.eq.s32.totalorder %v709, 127
      %vm791 = vcmp.eq.s32.totalorder %v710, 127
      %vm792 = vcmp.eq.s32.totalorder %v711, 127
      %vm793 = vcmp.eq.s32.totalorder %v712, 127
      %vm794 = vcmp.eq.s32.totalorder %v713, 127
      %vm795 = vcmp.eq.s32.totalorder %v714, 127
      %vm796 = vcmp.eq.s32.totalorder %v715, 127
      %vm797 = vcmp.eq.s32.totalorder %v716, 127
      %vm798 = vcmp.eq.s32.totalorder %v717, 127
      %vm799 = vcmp.eq.s32.totalorder %v718, 127
      %vm800 = vcmp.eq.s32.totalorder %v719, 127
      %v801 = vrot.slane %v495, 1
      %v802 = vrot.slane %v496, 1
      %v803 = vrot.slane %v497, 1
      %v804 = vrot.slane %v498, 1
      %v805 = vrot.slane %v499, 1
      %v806 = vrot.slane %v500, 1
      %v807 = vrot.slane %v501, 1
      %v808 = vrot.slane %v502, 1
      %v809 = vrot.slane %v503, 1
      %v810 = vrot.slane %v504, 1
      %v811 = vrot.slane %v505, 1
      %v812 = vrot.slane %v506, 1
      %v813 = vrot.slane %v507, 1
      %v814 = vrot.slane %v508, 1
      %v815 = vrot.slane %v509, 1
      %v816 = vrot.slane %v510, 1
      %vm817 = vcmp.lt.s32.totalorder %v512, 7
      %v818 = vsel %vm817, %v815, %v816
      %v819 = vsel %vm817, %v814, %v815
      %v820 = vsel %vm817, %v813, %v814
      %v821 = vsel %vm817, %v812, %v813
      %v822 = vsel %vm817, %v811, %v812
      %v823 = vsel %vm817, %v810, %v811
      %v824 = vsel %vm817, %v809, %v810
      %v825 = vsel %vm817, %v808, %v809
      %v826 = vsel %vm817, %v807, %v808
      %v827 = vsel %vm817, %v806, %v807
      %v828 = vsel %vm817, %v805, %v806
      %v829 = vsel %vm817, %v804, %v805
      %v830 = vsel %vm817, %v803, %v804
      %v831 = vsel %vm817, %v802, %v803
      %v832 = vsel %vm817, %v801, %v802
      %v833 = vsel %vm817, %v816, %v801
      %v834 = vsel %vm785, 0.0, %v832
      %v835 = vsel %vm786, 0.0, %v831
      %v836 = vsel %vm787, 0.0, %v830
      %v837 = vsel %vm788, 0.0, %v829
      %v838 = vsel %vm789, 0.0, %v828
      %v839 = vsel %vm790, 0.0, %v827
      %v840 = vsel %vm791, 0.0, %v826
      %v841 = vsel %vm792, 0.0, %v825
      %v842 = vsel %vm793, 0.0, %v824
      %v843 = vsel %vm794, 0.0, %v823
      %v844 = vsel %vm795, 0.0, %v822
      %v845 = vsel %vm796, 0.0, %v821
      %v846 = vsel %vm797, 0.0, %v820
      %v847 = vsel %vm798, 0.0, %v819
      %v848 = vsel %vm799, 0.0, %v818
      %v849 = vsel %vm800, 0.0, %v833
      %866 = vrot.lane.b32.xlu0 %v495, 32
      %v867 = vpop.permute.xlu0 %866
      %868 = vrot.lane.b32.xlu0 %v496, 32
      %v869 = vpop.permute.xlu0 %868
      %870 = vrot.lane.b32.xlu0 %v497, 32
      %v871 = vpop.permute.xlu0 %870
      %872 = vrot.lane.b32.xlu0 %v498, 32
      %v873 = vpop.permute.xlu0 %872
      %874 = vrot.lane.b32.xlu0 %v499, 32
      %v875 = vpop.permute.xlu0 %874
      %876 = vrot.lane.b32.xlu0 %v500, 32
      %v877 = vpop.permute.xlu0 %876
      %878 = vrot.lane.b32.xlu0 %v501, 32
      %v879 = vpop.permute.xlu0 %878
      %880 = vrot.lane.b32.xlu0 %v502, 32
      %v881 = vpop.permute.xlu0 %880
      %882 = vrot.lane.b32.xlu0 %v503, 32
      %v883 = vpop.permute.xlu0 %882
      %884 = vrot.lane.b32.xlu0 %v504, 32
      %v885 = vpop.permute.xlu0 %884
      %886 = vrot.lane.b32.xlu0 %v505, 32
      %v887 = vpop.permute.xlu0 %886
      %888 = vrot.lane.b32.xlu0 %v506, 32
      %v889 = vpop.permute.xlu0 %888
      %890 = vrot.lane.b32.xlu0 %v507, 32
      %v891 = vpop.permute.xlu0 %890
      %892 = vrot.lane.b32.xlu0 %v508, 32
      %v893 = vpop.permute.xlu0 %892
      %894 = vrot.lane.b32.xlu0 %v509, 32
      %v895 = vpop.permute.xlu0 %894
      %896 = vrot.lane.b32.xlu0 %v510, 32
      %v897 = vpop.permute.xlu0 %896
      %930 = vrot.lane.b32.xlu0 %v834, 64
      %v931 = vpop.permute.xlu0 %930
      %932 = vrot.lane.b32.xlu0 %v835, 64
      %v933 = vpop.permute.xlu0 %932
      %934 = vrot.lane.b32.xlu0 %v836, 64
      %v935 = vpop.permute.xlu0 %934
      %936 = vrot.lane.b32.xlu0 %v837, 64
      %v937 = vpop.permute.xlu0 %936
      %938 = vrot.lane.b32.xlu0 %v838, 64
      %v939 = vpop.permute.xlu0 %938
      %940 = vrot.lane.b32.xlu0 %v839, 64
      %v941 = vpop.permute.xlu0 %940
      %942 = vrot.lane.b32.xlu0 %v840, 64
      %v943 = vpop.permute.xlu0 %942
      %944 = vrot.lane.b32.xlu0 %v841, 64
      %v945 = vpop.permute.xlu0 %944
      %946 = vrot.lane.b32.xlu0 %v842, 64
      %v947 = vpop.permute.xlu0 %946
      %948 = vrot.lane.b32.xlu0 %v843, 64
      %v949 = vpop.permute.xlu0 %948
      %950 = vrot.lane.b32.xlu0 %v844, 64
      %v951 = vpop.permute.xlu0 %950
      %952 = vrot.lane.b32.xlu0 %v845, 64
      %v953 = vpop.permute.xlu0 %952
      %954 = vrot.lane.b32.xlu0 %v846, 64
      %v955 = vpop.permute.xlu0 %954
      %956 = vrot.lane.b32.xlu0 %v847, 64
      %v957 = vpop.permute.xlu0 %956
      %958 = vrot.lane.b32.xlu0 %v848, 64
      %v959 = vpop.permute.xlu0 %958
      %960 = vrot.lane.b32.xlu0 %v849, 64
      %v961 = vpop.permute.xlu0 %960
      %vm978 = vcmask 261120
      %v979 = vsel %vm978, %v769, %v867
      %v980 = vsel %vm978, %v770, %v869
      %v981 = vsel %vm978, %v771, %v871
      %v982 = vsel %vm978, %v772, %v873
      %v983 = vsel %vm978, %v773, %v875
      %v984 = vsel %vm978, %v774, %v877
      %v985 = vsel %vm978, %v775, %v879
      %v986 = vsel %vm978, %v776, %v881
      %v987 = vsel %vm978, %v777, %v883
      %v988 = vsel %vm978, %v778, %v885
      %v989 = vsel %vm978, %v779, %v887
      %v990 = vsel %vm978, %v780, %v889
      %v991 = vsel %vm978, %v781, %v891
      %v992 = vsel %vm978, %v782, %v893
      %v993 = vsel %vm978, %v783, %v895
      %v994 = vsel %vm978, %v784, %v897
      %vm995 = vcmask 523264
      %v996 = vsel %vm995, %v979, %v931
      %v997 = vsel %vm995, %v980, %v933
      %v998 = vsel %vm995, %v981, %v935
      %v999 = vsel %vm995, %v982, %v937
      %v1000 = vsel %vm995, %v983, %v939
      %v1001 = vsel %vm995, %v984, %v941
      %v1002 = vsel %vm995, %v985, %v943
      %v1003 = vsel %vm995, %v986, %v945
      %v1004 = vsel %vm995, %v987, %v947
      %v1005 = vsel %vm995, %v988, %v949
      %v1006 = vsel %vm995, %v989, %v951
      %v1007 = vsel %vm995, %v990, %v953
      %v1008 = vsel %vm995, %v991, %v955
      %v1009 = vsel %vm995, %v992, %v957
      %v1010 = vsel %vm995, %v993, %v959
      %v1011 = vsel %vm995, %v994, %v961
      %v1012 = vpack.c.bf16 %v997, %v996
      %v1013 = vpack.c.bf16 %v999, %v998
      %v1014 = vpack.c.bf16 %v1001, %v1000
      %v1015 = vpack.c.bf16 %v1003, %v1002
      %v1016 = vpack.c.bf16 %v1005, %v1004
      %v1017 = vpack.c.bf16 %v1007, %v1006
      %v1018 = vpack.c.bf16 %v1009, %v1008
      %v1019 = vpack.c.bf16 %v1011, %v1010
      %v1020 = vld [vmem:[%s3] sm:$0xf]
      %v1021 = vld [vmem:[%s3 + $0x4] sm:$0xf]
      %v1022 = vld [vmem:[%s3 + $0x8] sm:$0xf]
      %v1023 = vld [vmem:[%s3 + $0xc] sm:$0xf]
      %v1024 = vld [vmem:[%s3 + $0x10] sm:$0xf]
      %v1025 = vld [vmem:[%s3 + $0x14] sm:$0xf]
      %v1026 = vld [vmem:[%s3 + $0x18] sm:$0xf]
      %v1027 = vld [vmem:[%s3 + $0x1c] sm:$0xf]
      %v1028 = vld [vmem:[%s3 + $0x20] sm:$0xf]
      %v1029 = vld [vmem:[%s3 + $0x24] sm:$0xf]
      %v1030 = vld [vmem:[%s3 + $0x28] sm:$0xf]
      %v1031 = vld [vmem:[%s3 + $0x2c] sm:$0xf]
      %v1032 = vld [vmem:[%s4] sm:$0x1]
      %v1034 = vperm.slane %v1032, 0
      %v1048 = vunpack.c.l.b16 %v1020
      %v1049 = vunpack.c.l.b16 %v1021
      %v1050 = vunpack.c.l.b16 %v1022
      %v1051 = vunpack.c.l.b16 %v1023
      %v1052 = vunpack.c.l.b16 %v1024
      %v1053 = vunpack.c.l.b16 %v1025
      %v1054 = vunpack.c.l.b16 %v1026
      %v1055 = vunpack.c.l.b16 %v1027
      %v1056 = vunpack.c.l.b16 %v1028
      %v1057 = vunpack.c.l.b16 %v1029
      %v1058 = vunpack.c.l.b16 %v1030
      %v1059 = vunpack.c.l.b16 %v1031
      %v1060 = vpack.c.b16 %v1049, %v1048
      %v1061 = vpack.c.b16 %v1051, %v1050
      %v1062 = vpack.c.b16 %v1053, %v1052
      %v1063 = vpack.c.b16 %v1055, %v1054
      %v1064 = vpack.c.b16 %v1057, %v1056
      %v1065 = vpack.c.b16 %v1059, %v1058
      %vm1072 = vcmask 785408
      %v1074 = vsel %vm1072, %v1012, 0
      %v1077 = vsel %vm1072, %v1013, 0
      %v1080 = vsel %vm1072, %v1014, 0
      %v1083 = vsel %vm1072, %v1015, 0
      %v1086 = vsel %vm1072, %v1016, 0
      %v1089 = vsel %vm1072, %v1017, 0
      %v1092 = vsel %vm1072, %v1018, 0
      %v1095 = vsel %vm1072, %v1019, 0
      %1097 = vmatpush.bf16.msra.mxu0 0
      %1098 = vmatpush.bf16.msra.mxu0 0
      %1099 = vmatpush.bf16.msra.mxu0 %v1065
      %1100 = vmatpush.bf16.msra.mxu0 %v1064
      %1101 = vmatpush.bf16.msra.mxu0 %v1063
      %1102 = vmatpush.bf16.msra.mxu0 %v1062
      %1103 = vmatpush.bf16.msra.mxu0 %v1061
      %1104 = vmatpush.bf16.msra.mxu0 %v1060
      %1105 = vmatmul.bf16.gmra.mxu0 %v1074
      %v1106 = vpop.f32.mrf.mxu0
      %v1107 = vadd.f32 %v1034, %v1106
      %v1108 = vpop.f32.mrf.mxu0
      %v1109 = vadd.f32 %v1034, %v1108
      %1110 = vmatmul.bf16.gmra.mxu0 %v1077
      %v1111 = vpop.f32.mrf.mxu0
      %v1112 = vadd.f32 %v1034, %v1111
      %v1113 = vpop.f32.mrf.mxu0
      %v1114 = vadd.f32 %v1034, %v1113
      %1115 = vmatmul.bf16.gmra.mxu0 %v1080
      %v1116 = vpop.f32.mrf.mxu0
      %v1117 = vadd.f32 %v1034, %v1116
      %v1118 = vpop.f32.mrf.mxu0
      %v1119 = vadd.f32 %v1034, %v1118
      %1120 = vmatmul.bf16.gmra.mxu0 %v1083
      %v1121 = vpop.f32.mrf.mxu0
      %v1122 = vadd.f32 %v1034, %v1121
      %v1123 = vpop.f32.mrf.mxu0
      %v1124 = vadd.f32 %v1034, %v1123
      %1125 = vmatmul.bf16.gmra.mxu0 %v1086
      %v1126 = vpop.f32.mrf.mxu0
      %v1127 = vadd.f32 %v1034, %v1126
      %v1128 = vpop.f32.mrf.mxu0
      %v1129 = vadd.f32 %v1034, %v1128
      %1130 = vmatmul.bf16.gmra.mxu0 %v1089
      %v1131 = vpop.f32.mrf.mxu0
      %v1132 = vadd.f32 %v1034, %v1131
      %v1133 = vpop.f32.mrf.mxu0
      %v1134 = vadd.f32 %v1034, %v1133
      %1135 = vmatmul.bf16.gmra.mxu0 %v1092
      %v1136 = vpop.f32.mrf.mxu0
      %v1137 = vadd.f32 %v1034, %v1136
      %v1138 = vpop.f32.mrf.mxu0
      %v1139 = vadd.f32 %v1034, %v1138
      %1140 = vmatmul.bf16.gmra.mxu0 %v1095
      %v1141 = vpop.f32.mrf.mxu0
      %v1142 = vadd.f32 %v1034, %v1141
      %v1143 = vpop.f32.mrf.mxu0
      %v1144 = vadd.f32 %v1034, %v1143
      %1145 = vdwg.mxu0
      %1146 = vst.msk [vmem:[%s342] sm:$0xff] %vm978, %v1107
      %1147 = vst.msk [vmem:[%s342 + $0x8] sm:$0xff] %vm978, %v1109
      %1148 = vst.msk [vmem:[%s342 + $0x10] sm:$0xff] %vm978, %v1112
      %1149 = vst.msk [vmem:[%s342 + $0x18] sm:$0xff] %vm978, %v1114
      %1150 = vst.msk [vmem:[%s342 + $0x20] sm:$0xff] %vm978, %v1117
      %1151 = vst.msk [vmem:[%s342 + $0x28] sm:$0xff] %vm978, %v1119
      %1152 = vst.msk [vmem:[%s342 + $0x30] sm:$0xff] %vm978, %v1122
      %1153 = vst.msk [vmem:[%s342 + $0x38] sm:$0xff] %vm978, %v1124
      %1154 = vst.msk [vmem:[%s342 + $0x40] sm:$0xff] %vm978, %v1127
      %1155 = vst.msk [vmem:[%s342 + $0x48] sm:$0xff] %vm978, %v1129
      %1156 = vst.msk [vmem:[%s342 + $0x50] sm:$0xff] %vm978, %v1132
      %1157 = vst.msk [vmem:[%s342 + $0x58] sm:$0xff] %vm978, %v1134
      %1158 = vst.msk [vmem:[%s342 + $0x60] sm:$0xff] %vm978, %v1137
      %1159 = vst.msk [vmem:[%s342 + $0x68] sm:$0xff] %vm978, %v1139
      %1160 = vst.msk [vmem:[%s342 + $0x70] sm:$0xff] %vm978, %v1142
      %1161 = vst.msk [vmem:[%s342 + $0x78] sm:$0xff] %vm978, %v1144
      %v1162 = vpack.c.bf16 %v1109, %v1107
      %v1163 = vpack.c.bf16 %v1114, %v1112
      %v1164 = vpack.c.bf16 %v1119, %v1117
      %v1165 = vpack.c.bf16 %v1124, %v1122
      %v1166 = vpack.c.bf16 %v1129, %v1127
      %v1167 = vpack.c.bf16 %v1134, %v1132
      %v1168 = vpack.c.bf16 %v1139, %v1137
      %v1169 = vpack.c.bf16 %v1144, %v1142
      %v1170 = vld [vmem:[%s5] sm:$0xf]
      %v1171 = vld [vmem:[%s5 + $0x4] sm:$0xf]
      %v1172 = vld [vmem:[%s5 + $0x8] sm:$0xf]
      %v1173 = vld [vmem:[%s5 + $0xc] sm:$0xf]
      %v1178 = vunpack.c.l.b16 %v1170
      %v1179 = vunpack.c.l.b16 %v1171
      %v1180 = vunpack.c.l.b16 %v1172
      %v1181 = vunpack.c.l.b16 %v1173
      %v1182 = vpack.c.b16 %v1179, %v1178
      %v1183 = vpack.c.b16 %v1181, %v1180
      %v1187 = vsel %vm978, %v1162, 0
      %v1190 = vsel %vm978, %v1163, 0
      %v1193 = vsel %vm978, %v1164, 0
      %v1196 = vsel %vm978, %v1165, 0
      %v1199 = vsel %vm978, %v1166, 0
      %v1202 = vsel %vm978, %v1167, 0
      %v1205 = vsel %vm978, %v1168, 0
      %v1208 = vsel %vm978, %v1169, 0
      %1210 = vmatpush.bf16.msra.mxu0 0
      %1211 = vmatpush.bf16.msra.mxu0 0
      %1212 = vmatpush.bf16.msra.mxu0 0
      %1213 = vmatpush.bf16.msra.mxu0 0
      %1214 = vmatpush.bf16.msra.mxu0 0
      %1215 = vmatpush.bf16.msra.mxu0 0
      %1216 = vmatpush.bf16.msra.mxu0 %v1183
      %1217 = vmatpush.bf16.msra.mxu0 %v1182
      %1218 = vmatmul.bf16.gmra.mxu0 %v1187
      %v1219 = vpop.f32.mrf.mxu0
      %v1220 = vadd.f32 0.0, %v1219
      %v1221 = vpop.f32.mrf.mxu0
      %v1222 = vadd.f32 0.0, %v1221
      %1223 = vmatmul.bf16.gmra.mxu0 %v1190
      %v1224 = vpop.f32.mrf.mxu0
      %v1225 = vadd.f32 0.0, %v1224
      %v1226 = vpop.f32.mrf.mxu0
      %v1227 = vadd.f32 0.0, %v1226
      %1228 = vmatmul.bf16.gmra.mxu0 %v1193
      %v1229 = vpop.f32.mrf.mxu0
      %v1230 = vadd.f32 0.0, %v1229
      %v1231 = vpop.f32.mrf.mxu0
      %v1232 = vadd.f32 0.0, %v1231
      %1233 = vmatmul.bf16.gmra.mxu0 %v1196
      %v1234 = vpop.f32.mrf.mxu0
      %v1235 = vadd.f32 0.0, %v1234
      %v1236 = vpop.f32.mrf.mxu0
      %v1237 = vadd.f32 0.0, %v1236
      %1238 = vmatmul.bf16.gmra.mxu0 %v1199
      %v1239 = vpop.f32.mrf.mxu0
      %v1240 = vadd.f32 0.0, %v1239
      %v1241 = vpop.f32.mrf.mxu0
      %v1242 = vadd.f32 0.0, %v1241
      %1243 = vmatmul.bf16.gmra.mxu0 %v1202
      %v1244 = vpop.f32.mrf.mxu0
      %v1245 = vadd.f32 0.0, %v1244
      %v1246 = vpop.f32.mrf.mxu0
      %v1247 = vadd.f32 0.0, %v1246
      %1248 = vmatmul.bf16.gmra.mxu0 %v1205
      %v1249 = vpop.f32.mrf.mxu0
      %v1250 = vadd.f32 0.0, %v1249
      %v1251 = vpop.f32.mrf.mxu0
      %v1252 = vadd.f32 0.0, %v1251
      %1253 = vmatmul.bf16.gmra.mxu0 %v1208
      %v1254 = vpop.f32.mrf.mxu0
      %v1255 = vadd.f32 0.0, %v1254
      %v1256 = vpop.f32.mrf.mxu0
      %v1257 = vadd.f32 0.0, %v1256
      %1258 = vdwg.mxu0
      %v1259 = vpack.c.bf16 %v1222, %v1220
      %v1260 = vpack.c.bf16 %v1227, %v1225
      %v1261 = vpack.c.bf16 %v1232, %v1230
      %v1262 = vpack.c.bf16 %v1237, %v1235
      %v1263 = vpack.c.bf16 %v1242, %v1240
      %v1264 = vpack.c.bf16 %v1247, %v1245
      %v1265 = vpack.c.bf16 %v1252, %v1250
      %v1266 = vpack.c.bf16 %v1257, %v1255
      %v1267 = vld [vmem:[%s7] sm:$0xf]
      %v1269 = vsel %vm978, %v1267, 0
      %v1272 = vsel %vm978, %v1259, 0
      %v1275 = vsel %vm978, %v1260, 0
      %v1278 = vsel %vm978, %v1261, 0
      %v1281 = vsel %vm978, %v1262, 0
      %v1284 = vsel %vm978, %v1263, 0
      %v1287 = vsel %vm978, %v1264, 0
      %v1290 = vsel %vm978, %v1265, 0
      %v1293 = vsel %vm978, %v1266, 0
      %1295 = vmatpush.bf16.xpose.msra.mxu0 %v1293
      %1296 = vmatpush.bf16.xpose.msra.mxu0 %v1290
      %1297 = vmatpush.bf16.xpose.msra.mxu0 %v1287
      %1298 = vmatpush.bf16.xpose.msra.mxu0 %v1284
      %1299 = vmatpush.bf16.xpose.msra.mxu0 %v1281
      %1300 = vmatpush.bf16.xpose.msra.mxu0 %v1278
      %1301 = vmatpush.bf16.xpose.msra.mxu0 %v1275
      %1302 = vmatpush.bf16.xpose.msra.mxu0 %v1272
      %1303 = vmatmul.bf16.gmra.mxu0 %v1269
      %v1304 = vpop.f32.mrf.mxu0
      %v1305 = vadd.f32 0.0, %v1304
      %v1306 = vpop.f32.mrf.mxu0
      %1307 = vdwg.mxu0
      %v1308 = vmul.f32 %v1305, 0.17677669
      %1309 = vmax.xlane.f32.xlu0 %v1308
      %v1310 = vpop.xlane.xlu0 %1309
      %v1311 = vsub.f32 %v1308, %v1310
      %v1312 = vmul.f32 %v1311, 1.442695
      %v1313 = vpow.pop %v1312
      %1314 = vadd.xlane.f32.xlu0 %v1313
      %v1315 = vpop.xlane.xlu0 %1314
      %v1316 = vrcp.pop %v1315
      %v1317 = vmul.f32 %v1313, %v1316
      %v1318 = vpack.c.bf16 %v1317, %v1317
      %1327 = vrot.lane.b32.xlu0 %v1259, 96
      %v1328 = vpop.permute.xlu0 %1327
      %1329 = vrot.lane.b32.xlu0 %v1260, 96
      %v1330 = vpop.permute.xlu0 %1329
      %1331 = vrot.lane.b32.xlu0 %v1261, 96
      %v1332 = vpop.permute.xlu0 %1331
      %1333 = vrot.lane.b32.xlu0 %v1262, 96
      %v1334 = vpop.permute.xlu0 %1333
      %1335 = vrot.lane.b32.xlu0 %v1263, 96
      %v1336 = vpop.permute.xlu0 %1335
      %1337 = vrot.lane.b32.xlu0 %v1264, 96
      %v1338 = vpop.permute.xlu0 %1337
      %1339 = vrot.lane.b32.xlu0 %v1265, 96
      %v1340 = vpop.permute.xlu0 %1339
      %1341 = vrot.lane.b32.xlu0 %v1266, 96
      %v1342 = vpop.permute.xlu0 %1341
      %1351 = vmatpush.bf16.msra.mxu0 %v1342
      %1352 = vmatpush.bf16.msra.mxu0 %v1340
      %1353 = vmatpush.bf16.msra.mxu0 %v1338
      %1354 = vmatpush.bf16.msra.mxu0 %v1336
      %1355 = vmatpush.bf16.msra.mxu0 %v1334
      %1356 = vmatpush.bf16.msra.mxu0 %v1332
      %1357 = vmatpush.bf16.msra.mxu0 %v1330
      %1358 = vmatpush.bf16.msra.mxu0 %v1328
      %1359 = vmatmul.bf16.gmra.mxu0 %v1318
      %v1360 = vpop.f32.mrf.mxu0
      %v1361 = vadd.f32 0.0, %v1360
      %v1362 = vpop.f32.mrf.mxu0
      %1363 = vdwg.mxu0
      %vm1364 = vcmask 785920
      %v1365 = vsel %vm1364, %v1220, 0.0
      %v1366 = vsel %vm1364, %v1222, 0.0
      %v1367 = vadd.f32 %v1365, %v1366
      %v1368 = vsel %vm1364, %v1225, 0.0
      %v1369 = vadd.f32 %v1367, %v1368
      %v1370 = vsel %vm1364, %v1227, 0.0
      %v1371 = vadd.f32 %v1369, %v1370
      %v1372 = vsel %vm1364, %v1230, 0.0
      %v1373 = vadd.f32 %v1371, %v1372
      %v1374 = vsel %vm1364, %v1232, 0.0
      %v1375 = vadd.f32 %v1373, %v1374
      %v1376 = vsel %vm1364, %v1235, 0.0
      %v1377 = vadd.f32 %v1375, %v1376
      %v1378 = vsel %vm1364, %v1237, 0.0
      %v1379 = vadd.f32 %v1377, %v1378
      %v1380 = vsel %vm1364, %v1240, 0.0
      %v1381 = vadd.f32 %v1379, %v1380
      %v1382 = vsel %vm1364, %v1242, 0.0
      %v1383 = vadd.f32 %v1381, %v1382
      %v1384 = vsel %vm1364, %v1245, 0.0
      %v1385 = vadd.f32 %v1383, %v1384
      %v1386 = vsel %vm1364, %v1247, 0.0
      %v1387 = vadd.f32 %v1385, %v1386
      %v1388 = vsel %vm1364, %v1250, 0.0
      %v1389 = vadd.f32 %v1387, %v1388
      %v1390 = vsel %vm1364, %v1252, 0.0
      %v1391 = vadd.f32 %v1389, %v1390
      %v1392 = vsel %vm1364, %v1255, 0.0
      %v1393 = vadd.f32 %v1391, %v1392
      %v1394 = vsel %vm1364, %v1257, 0.0
      %v1395 = vadd.f32 %v1393, %v1394
      %v1396 = vrot.slane %v1395, 4
      %v1397 = vadd.f32 %v1395, %v1396
      %v1398 = vrot.slane %v1397, 2
      %v1399 = vadd.f32 %v1397, %v1398
      %v1400 = vrot.slane %v1399, 1
      %v1401 = vadd.f32 %v1399, %v1400
      %v1402 = vmul.f32 %v1401, 0.0078125
      %v1403 = vld [vmem:[%s6] sm:$0x1]
      %v1405 = vperm.slane %v1403, 0
      %1406 = vrot.lane.b32.xlu0 %v1405, 64
      %v1407 = vpop.permute.xlu0 %1406
      %v1409 = vadd.f32 %v1402, %v1407
      %1411 = vrot.lane.b32.xlu0 %v1409, 64
      %v1412 = vpop.permute.xlu0 %1411
      %1414 = vst.msk [vmem:[%s348] sm:$0xff] %vm978, %v1361
      %vm1415 = vcmask 253952
      %1416 = vst.msk [vmem:[%s348 + $0x8] sm:$0x1] %vm1415, %v1412
      %s1417 = smul.u32 16, %s21
      %p1418 = scmp.lt.s32.totalorder %s1417, 31
      %s1419 = scalar_select %p1418, %s1417, 31
      %s1420 = smul.addr %s1419, 8
      %s1421 = scalar_lea.vmem %s8, %s1420
      %p1422 = scmp.lt.s32.totalorder %s21, 1
      %s1423 = scalar_select %p1422, %s21, 1
      %s1424 = smul.addr %s1423, 2
      %s1425 = smul.addr %s1424, 8
      %s1426 = scalar_lea.vmem %s9, %s1425
      // Predicated region
      $region53: #{slotformer_pos2_forward.1} parent=51 // pred_check
        %p1427 = pneg %p212
      $region54: #{slotformer_pos2_forward.1} parent=51 // pred_check_branch
        %1429 = sbr.rel (%p1427) target = $region56
      $region55: #{slotformer_pos2_forward.1} parent=51 // pred_region
        %s1430 = smul.u32 16, %s21
      $region56: #{slotformer_pos2_forward.1} parent=51 // pred_fallthru
        _
      // Predicated region
      $region57: #{slotformer_pos2_forward.1} parent=51 // pred_check
        %p1431 = pneg %p238
      $region58: #{slotformer_pos2_forward.1} parent=51 // pred_check_branch
        %1433 = sbr.rel (%p1431) target = $region60
      $region59: #{slotformer_pos2_forward.1} parent=51 // pred_region
        _
      $region60: #{slotformer_pos2_forward.1} parent=51 // pred_fallthru
        _
    $region52: #{slotformer_pos2_forward.1} parent=5 // pred_fallthru
      _
    %p1434 = scmp.le.s32.totalorder 2, %s16
    // Predicated region
    $region61: #{slotformer_pos2_forward.1} parent=5 // pred_check
      %p1435 = pneg %p1434
    $region62: #{slotformer_pos2_forward.1} parent=5 // pred_check_branch
      %1437 = sbr.rel (%p1435) target = $region64
    $region63: #{slotformer_pos2_forward.1} parent=5 // pred_region
      %s1438 = ssub.s32 %s16, 2
      // Predicated region
      $region65: #{slotformer_pos2_forward.1} parent=63 // pred_check
        %p1439 = pneg %p218
      $region66: #{slotformer_pos2_forward.1} parent=63 // pred_check_branch
        %1441 = sbr.rel (%p1439) target = $region68
      $region67: #{slotformer_pos2_forward.1} parent=63 // pred_region
        %s1442 = smul.u32 16, %s22
        %p1443 = scmp.lt.s32.totalorder %s1442, 31
        %s1444 = scalar_select %p1443, %s1442, 31
        %s1445 = smul.addr %s1444, 8
        %s1446 = scalar_lea.vmem %s8, %s1445
      $region68: #{slotformer_pos2_forward.1} parent=63 // pred_fallthru
        _
      // Predicated region
      $region69: #{slotformer_pos2_forward.1} parent=63 // pred_check
        %p1447 = pneg %p244
      $region70: #{slotformer_pos2_forward.1} parent=63 // pred_check_branch
        %1449 = sbr.rel (%p1447) target = $region72
      $region71: #{slotformer_pos2_forward.1} parent=63 // pred_region
        %p1450 = scmp.lt.s32.totalorder %s22, 1
        %s1451 = scalar_select %p1450, %s22, 1
        %s1452 = smul.addr %s1451, 2
        %s1453 = smul.addr %s1452, 8
        %s1454 = scalar_lea.vmem %s9, %s1453
      $region72: #{slotformer_pos2_forward.1} parent=63 // pred_fallthru
        _
    $region64: #{slotformer_pos2_forward.1} parent=5 // pred_fallthru
      _
  $region6: #{slotformer_pos2_forward.1} parent=0 // loop_footer
    %s20 = sadd.s32 1, %s16
  $region7: #{slotformer_pos2_forward.1} parent=0 // loop_footer_branch
    %15 = sbr.rel target = $region3
  $region8: #{slotformer_pos2_forward.1} parent=0 // loop_exit
    _

</llo_original>
